<compile_context>
chip_gen: v5e
topology: v5e:2x2
jax: 0.10.0
libtpu: 0.0.40
codegen_flags: <defaults>
</compile_context>

<pallas_src>
import jax
import jax.numpy as jnp
from jax.experimental import pallas as pl
from jax.experimental.pallas import tpu as pltpu

_SUBLANE = 8


def _round_up(v, m):
    return (v + m - 1) // m * m


def _vmem_budget_bytes():
    # Generation-aware scoped-VMEM budget (the scoped default is only 16/32 MiB).
    # ~3/4 of physical capacity leaves headroom for compiler-internal scratch:
    # ~96 MiB on v5e/v6e (128 MiB VMEM), ~48 MiB on v7x (64 MiB per TC).
    try:
        cap = int(pltpu.get_tpu_info().vmem_capacity_bytes)
    except Exception:
        cap = 64 << 20  # conservative fallback (v7x per-TC size)
    return max(16 << 20, (cap * 3) // 4)


def _pick_batch_tile(n, x_row_bytes, o_row_bytes, w_bytes, budget):
    # Largest batch tile whose double-buffered x / out blocks (+ resident params)
    # fit the VMEM budget; bigger tiles amortize the ~0.35 us per-grid-step cost.
    fixed = 2 * w_bytes + (4 << 20)
    avail = max(budget - fixed, 2 << 20)
    tm = avail // (2 * (x_row_bytes + o_row_bytes))
    tm = max(_SUBLANE, min(2048, int(tm)) // _SUBLANE * _SUBLANE)
    tm = min(tm, _round_up(n, _SUBLANE))
    # Guarantee >= 2 grid steps when there is enough work: lets the pipeline
    # overlap DMA with compute and shards the batch across both v7x TensorCores.
    if pl.cdiv(n, tm) < 2 and n >= 2 * _SUBLANE:
        tm = max(_SUBLANE, _round_up(pl.cdiv(n, 2), _SUBLANE))
    return tm


# ---------------------------------------------------------------------------
# Kernels
# ---------------------------------------------------------------------------

def _standardize_resident_kernel(x_ref, mu_ref, inv_ref, w_ref, b_ref, o_ref):
    # f32 centering in-kernel (matches reference numerics), bf16 MXU matmul with
    # f32 accumulation; bias already carries the folded output affine.
    xn = (x_ref[...].astype(jnp.float32) - mu_ref[...]) * inv_ref[...]
    acc = jnp.dot(xn.astype(jnp.bfloat16), w_ref[...],
                  preferred_element_type=jnp.float32)
    o_ref[...] = (acc + b_ref[...]).astype(o_ref.dtype)


def _standardize_tiled_kernel(x_ref, mu_ref, inv_ref, w_ref, b_ref, o_ref, acc_ref):
    # P3 pattern: K axis (grid axis 2, innermost, "arbitrary"); f32 VMEM acc.
    k = pl.program_id(2)

    @pl.when(k == 0)
    def _():
        acc_ref[...] = jnp.zeros_like(acc_ref)

    xn = (x_ref[...].astype(jnp.float32) - mu_ref[...]) * inv_ref[...]
    acc_ref[...] += jnp.dot(xn.astype(jnp.bfloat16), w_ref[...],
                            preferred_element_type=jnp.float32)

    @pl.when(k == pl.num_programs(2) - 1)
    def _():
        o_ref[...] = (acc_ref[...] + b_ref[...]).astype(o_ref.dtype)


# ---------------------------------------------------------------------------
# Dispatch paths
# ---------------------------------------------------------------------------

def _resident_matmul_path(x, muin, inv_sin, w_scaled, b_fold, out_dtype, budget):
    n, d_in = x.shape
    d_out = w_scaled.shape[1]
    d_out_p = _round_up(d_out, 128)      # lane-dense output stores

    # Parameter-side padding only (W / bias); x is never padded or pre-cast.
    if d_out_p != d_out:
        w_scaled = jnp.pad(w_scaled, ((0, 0), (0, d_out_p - d_out)))
        b_fold = jnp.pad(b_fold, ((0, d_out_p - d_out),))
    w_bf = w_scaled.astype(jnp.bfloat16)
    b2 = b_fold.reshape(1, d_out_p)
    mu2 = muin.reshape(1, d_in)
    inv2 = inv_sin.reshape(1, d_in)

    x_isz = jnp.dtype(x.dtype).itemsize
    out_isz = jnp.dtype(out_dtype).itemsize
    w_bytes = d_in * d_out_p * 2

    tm = _pick_batch_tile(n, d_in * x_isz, d_out_p * out_isz, w_bytes, budget)
    grid = (pl.cdiv(n, tm),)

    footprint = (2 * (tm * d_in * x_isz + tm * d_out_p * out_isz)
                 + 2 * (w_bytes + d_out_p * 4 + 2 * d_in * 4) + (4 << 20))
    vmem_limit = int(min(budget, max(footprint, 16 << 20)))

    def call(single_buffer_weights):
        res_kw = {"pipeline_mode": pl.Buffered(1)} if single_buffer_weights else {}
        return pl.pallas_call(
            _standardize_resident_kernel,
            out_shape=jax.ShapeDtypeStruct((n, d_out_p), out_dtype),
            grid=grid,
            in_specs=[
                pl.BlockSpec((tm, d_in), lambda i: (i, 0)),            # x tile (pipelined)
                pl.BlockSpec((1, d_in), lambda i: (0, 0), **res_kw),   # muin (resident)
                pl.BlockSpec((1, d_in), lambda i: (0, 0), **res_kw),   # 1/sin (resident)
                pl.BlockSpec((d_in, d_out_p), lambda i: (0, 0), **res_kw),  # W' (resident)
                pl.BlockSpec((1, d_out_p), lambda i: (0, 0), **res_kw),     # b' (resident)
            ],
            out_specs=pl.BlockSpec((tm, d_out_p), lambda i: (i, 0)),
            compiler_params=pltpu.CompilerParams(
                dimension_semantics=("parallel",),
                vmem_limit_bytes=vmem_limit,
            ),
        )(x, mu2, inv2, w_bf, b2)

    try:
        y = call(True)    # single-buffer resident params (VMEM saving, esp. v7x)
    except Exception:
        # pl.Buffered(1) not supported by this jax build -> default buffering.
        y = call(False)
    return y, d_out_p


def _tiled_matmul_path(x, muin, inv_sin, w_scaled, b_fold, out_dtype, budget):
    # Fallback for weights too large to keep resident in VMEM (v7x: 64 MiB/TC).
    # 256-wide K/N tiles fully feed the 2x256x256 MXUs on v6e/v7x.
    n, d_in = x.shape
    d_out = w_scaled.shape[1]
    tk = tn = 256
    d_in_p = _round_up(d_in, tk)
    d_out_p = _round_up(d_out, tn)

    # The reduction (K) axis must be exactly covered: zero-pad x/stats/W along K
    # so the ragged tail never injects garbage into the accumulation (zero x/mu/
    # inv columns meet zero W rows -> exact).
    if d_in_p != d_in:
        x = jnp.pad(x, ((0, 0), (0, d_in_p - d_in)))
        muin = jnp.pad(muin, ((0, d_in_p - d_in),))
        inv_sin = jnp.pad(inv_sin, ((0, d_in_p - d_in),))
    if d_in_p != d_in or d_out_p != d_out:
        w_scaled = jnp.pad(w_scaled, ((0, d_in_p - d_in), (0, d_out_p - d_out)))
        b_fold = jnp.pad(b_fold, ((0, d_out_p - d_out),))
    w_bf = w_scaled.astype(jnp.bfloat16)
    b2 = b_fold.reshape(1, d_out_p)
    mu2 = muin.reshape(1, d_in_p)
    inv2 = inv_sin.reshape(1, d_in_p)

    x_isz = jnp.dtype(x.dtype).itemsize
    out_isz = jnp.dtype(out_dtype).itemsize
    tm = min(512, _round_up(n, _SUBLANE))
    grid = (pl.cdiv(n, tm), d_out_p // tn, d_in_p // tk)

    footprint = (2 * (tm * tk * x_isz + tk * tn * 2 + tn * 4 + 2 * tk * 4
                      + tm * tn * out_isz)
                 + tm * tn * 4 + (4 << 20))
    vmem_limit = int(min(budget, max(footprint, 16 << 20)))

    y = pl.pallas_call(
        _standardize_tiled_kernel,
        out_shape=jax.ShapeDtypeStruct((n, d_out_p), out_dtype),
        grid=grid,
        in_specs=[
            pl.BlockSpec((tm, tk), lambda i, j, k: (i, k)),   # x
            pl.BlockSpec((1, tk), lambda i, j, k: (0, k)),    # muin
            pl.BlockSpec((1, tk), lambda i, j, k: (0, k)),    # 1/sin
            pl.BlockSpec((tk, tn), lambda i, j, k: (k, j)),   # W'
            pl.BlockSpec((1, tn), lambda i, j, k: (0, j)),    # b'
        ],
        out_specs=pl.BlockSpec((tm, tn), lambda i, j, k: (i, j)),
        scratch_shapes=[pltpu.VMEM((tm, tn), jnp.float32)],
        compiler_params=pltpu.CompilerParams(
            dimension_semantics=("parallel", "parallel", "arbitrary"),
            vmem_limit_bytes=vmem_limit,
        ),
    )(x, mu2, inv2, w_bf, b2)
    return y, d_out_p


# ---------------------------------------------------------------------------
# Public wrapper
# ---------------------------------------------------------------------------

def standardize_forward(x, ds_stats, w, b, training=False, *,
                        out_dtype=None, w_resident_bytes_limit=None):
    """Standardize.forward (with a Linear inner model) as a Pallas TPU kernel.

    Args:
      x:        [N, D_in] input batch (EMLP models consume flat feature vectors).
      ds_stats: (muin, sin) or (muin, sin, muout, sout); per-feature or scalar.
      w, b:     Linear stand-in model params, [D_in, D_out] and [D_out].
      training: pass-through flag of the wrapped model (unused by the stand-in).
      out_dtype: output dtype; pass jnp.bfloat16 to halve the output HBM write
                 stream (largest win on v5e). Defaults to x.dtype.
      w_resident_bytes_limit: bf16-W size above which the K/N-tiled path is used
                 (None = auto: min(20 MiB, VMEM budget / 4)).
    """
    del training  # see TODO above

    n, d_in = x.shape
    d_out = w.shape[1]
    if out_dtype is None:
        out_dtype = x.dtype

    if len(ds_stats) == 2:
        muin, sin = ds_stats
        muout = jnp.zeros((d_out,), jnp.float32)
        sout = jnp.ones((d_out,), jnp.float32)
    else:
        muin, sin, muout, sout = ds_stats

    muin = jnp.broadcast_to(jnp.asarray(muin, jnp.float32), (d_in,))
    inv_sin = 1.0 / jnp.broadcast_to(jnp.asarray(sin, jnp.float32), (d_in,))
    muout = jnp.broadcast_to(jnp.asarray(muout, jnp.float32), (d_out,))
    sout = jnp.broadcast_to(jnp.asarray(sout, jnp.float32), (d_out,))
    w32 = jnp.asarray(w, jnp.float32)
    b32 = jnp.asarray(b, jnp.float32)

    # Fold only the OUTPUT affine into the parameters (one-time O(D_in*D_out)):
    #   sout * (xn @ W + b) + muout == xn @ (W*sout) + (sout*b + muout)
    # Input centering stays in-kernel in f32 (review numerics concern).
    w_scaled = w32 * sout[None, :]
    b_fold = sout * b32 + muout

    x = jnp.asarray(x)  # activations stay untouched; bf16 cast happens in-kernel

    budget = _vmem_budget_bytes()
    if w_resident_bytes_limit is None:
        w_resident_bytes_limit = min(20 << 20, budget // 4)
    w_bf16_bytes = d_in * _round_up(d_out, 128) * 2

    if w_bf16_bytes > w_resident_bytes_limit:
        y, d_out_p = _tiled_matmul_path(x, muin, inv_sin, w_scaled, b_fold,
                                        out_dtype, budget)
    else:
        y, d_out_p = _resident_matmul_path(x, muin, inv_sin, w_scaled, b_fold,
                                           out_dtype, budget)

    if d_out_p != d_out:
        y = y[:, :d_out]   # lane-pad column slice; skipped when d_out % 128 == 0
    return y


# ---------------------------------------------------------------------------
# Reference + self-test
# ---------------------------------------------------------------------------

def _reference(x, ds_stats, w, b):
    x = jnp.asarray(x, jnp.float32)
    if len(ds_stats) == 2:
        muin, sin = ds_stats
        return ((x - muin) / sin) @ w + b
    muin, sin, muout, sout = ds_stats
    return sout * (((x - muin) / sin) @ w + b) + muout


def _check(y, y_ref, name):
    err = float(jnp.max(jnp.abs(jnp.asarray(y, jnp.float32) - y_ref)))
    scale = float(jnp.max(jnp.abs(y_ref)))
    # bf16 matmul operands (f32 centering + f32 accumulate): scale-relative tol.
    assert err <= 5e-2 * scale + 1e-2, f"{name}: max err {err} vs scale {scale}"


if __name__ == "__main__":
    key = jax.random.PRNGKey(0)
    ks = jax.random.split(key, 16)

    # --- 1) 4-stat path, lane-aligned features, resident-W fast path --------
    N, DI, DO = 512, 128, 128
    x = jax.random.normal(ks[0], (N, DI), jnp.float32)
    w = jax.random.normal(ks[1], (DI, DO), jnp.float32) / jnp.sqrt(DI)
    b = jax.random.normal(ks[2], (DO,), jnp.float32) * 0.1
    muin = jax.random.normal(ks[3], (DI,), jnp.float32)
    sin = jnp.abs(jax.random.normal(ks[4], (DI,), jnp.float32)) + 0.5
    muout = jax.random.normal(ks[5], (DO,), jnp.float32)
    sout = jnp.abs(jax.random.normal(ks[6], (DO,), jnp.float32)) + 0.5
    y = jax.block_until_ready(
        standardize_forward(x, (muin, sin, muout, sout), w, b, training=False))
    _check(y, _reference(x, (muin, sin, muout, sout), w, b), "4-stat resident")

    # --- 2) 2-stat path, scalar stats, odd shapes, ragged batch tile --------
    N2, DI2, DO2 = 200, 96, 64
    x2 = jax.random.normal(ks[7], (N2, DI2), jnp.float32)
    w2 = jax.random.normal(ks[8], (DI2, DO2), jnp.float32) / jnp.sqrt(DI2)
    b2 = jax.random.normal(ks[9], (DO2,), jnp.float32) * 0.1
    stats2 = (0.25, 1.5)  # scalar mu/sigma exercise the broadcast path
    y2 = jax.block_until_ready(standardize_forward(x2, stats2, w2, b2, training=False))
    _check(y2, _reference(x2, stats2, w2, b2), "2-stat resident (odd shapes)")

    # --- 3) forced K/N-tiled fallback (as used when W' is too big for VMEM) --
    N3, DI3, DO3 = 72, 300, 320
    x3 = jax.random.normal(ks[10], (N3, DI3), jnp.float32)
    w3 = jax.random.normal(ks[11], (DI3, DO3), jnp.float32) / jnp.sqrt(DI3)
    b3 = jax.random.normal(ks[12], (DO3,), jnp.float32) * 0.1
    muin3 = jax.random.normal(ks[13], (DI3,), jnp.float32)
    sin3 = jnp.abs(jax.random.normal(ks[14], (DI3,), jnp.float32)) + 0.5
    muout3 = jax.random.normal(ks[15], (DO3,), jnp.float32)
    sout3 = jnp.full((DO3,), 2.0, jnp.float32)
    y3 = jax.block_until_ready(
        standardize_forward(x3, (muin3, sin3, muout3, sout3), w3, b3,
                            training=False, w_resident_bytes_limit=0))
    _check(y3, _reference(x3, (muin3, sin3, muout3, sout3), w3, b3), "4-stat tiled")

    print("KERNEL_OK")
</pallas_src>

<mosaic_0001>
module attributes {stable_mosaic.version = 11 : i64} {
  func.func @_standardize_resident_kernel(%arg0: i32, %arg1: memref<256x128xf32, #tpu.memory_space<vmem>>, %arg2: memref<1x128xf32, #tpu.memory_space<vmem>>, %arg3: memref<1x128xf32, #tpu.memory_space<vmem>>, %arg4: memref<128x128xbf16, #tpu.memory_space<vmem>>, %arg5: memref<1x128xf32, #tpu.memory_space<vmem>>, %arg6: memref<256x128xf32, #tpu.memory_space<vmem>>) attributes {dimension_semantics = [#tpu.dimension_semantics<parallel>], iteration_bounds = array<i64: 2>, scalar_prefetch = 0 : i64, scratch_operands = 0 : i64, tpu.core_type = #tpu.core_type<tc>, window_params = [{transform_indices = @transform_0, window_bounds = array<i64: 256, 128>}, {pipeline_mode = #tpu.pipeline_mode<synchronous>, transform_indices = @transform_1, window_bounds = array<i64: 1, 128>}, {pipeline_mode = #tpu.pipeline_mode<synchronous>, transform_indices = @transform_2, window_bounds = array<i64: 1, 128>}, {pipeline_mode = #tpu.pipeline_mode<synchronous>, transform_indices = @transform_3, window_bounds = array<i64: 128, 128>}, {pipeline_mode = #tpu.pipeline_mode<synchronous>, transform_indices = @transform_4, window_bounds = array<i64: 1, 128>}, {transform_indices = @transform_5, window_bounds = array<i64: 256, 128>}]} {
    %c0 = arith.constant 0 : index
    %c0_0 = arith.constant 0 : index
    %0 = vector.load %arg1[%c0, %c0_0] : memref<256x128xf32, #tpu.memory_space<vmem>>, vector<256x128xf32>
    %c0_1 = arith.constant 0 : index
    %c0_2 = arith.constant 0 : index
    %1 = vector.load %arg2[%c0_1, %c0_2] : memref<1x128xf32, #tpu.memory_space<vmem>>, vector<1x128xf32>
    %2 = vector.broadcast %1 : vector<1x128xf32> to vector<256x128xf32>
    %3 = arith.subf %0, %2 : vector<256x128xf32>
    %c0_3 = arith.constant 0 : index
    %c0_4 = arith.constant 0 : index
    %4 = vector.load %arg3[%c0_3, %c0_4] : memref<1x128xf32, #tpu.memory_space<vmem>>, vector<1x128xf32>
    %5 = vector.broadcast %4 : vector<1x128xf32> to vector<256x128xf32>
    %6 = arith.mulf %3, %5 : vector<256x128xf32>
    %7 = arith.truncf %6 : vector<256x128xf32> to vector<256x128xbf16>
    %c0_5 = arith.constant 0 : index
    %c0_6 = arith.constant 0 : index
    %8 = vector.load %arg4[%c0_5, %c0_6] : memref<128x128xbf16, #tpu.memory_space<vmem>>, vector<128x128xbf16>
    %cst = arith.constant dense<0.000000e+00> : vector<256x128xf32>
    %9 = tpu.matmul %7, %8, %cst {dimension_numbers = #tpu.dot_dimension_numbers<[1], [0], [0], [1], [0, 0, 1, 1], [], []>} : vector<256x128xbf16>, vector<128x128xbf16>, vector<256x128xf32> -> vector<256x128xf32>
    %c0_7 = arith.constant 0 : index
    %c0_8 = arith.constant 0 : index
    %10 = vector.load %arg5[%c0_7, %c0_8] : memref<1x128xf32, #tpu.memory_space<vmem>>, vector<1x128xf32>
    %11 = vector.broadcast %10 : vector<1x128xf32> to vector<256x128xf32>
    %12 = arith.addf %9, %11 : vector<256x128xf32>
    %c0_9 = arith.constant 0 : index
    %c0_10 = arith.constant 0 : index
    %13 = vector.load %arg6[%c0_9, %c0_10] : memref<256x128xf32, #tpu.memory_space<vmem>>, vector<256x128xf32>
    tpu.vector_store %arg6[%c0_9, %c0_10], %12 {strides = array<i32>} : memref<256x128xf32, #tpu.memory_space<vmem>>, vector<256x128xf32>,
    return
  }
  func.func @transform_0(%arg0: i32) -> (i32, i32) {
    %c0_i32 = arith.constant 0 : i32
    %c0_i32_0 = arith.constant 0 : i32
    return %arg0, %c0_i32 : i32, i32
  }
  func.func @transform_1(%arg0: i32) -> (i32, i32) {
    %c0_i32 = arith.constant 0 : i32
    %c0_i32_0 = arith.constant 0 : i32
    %c0_i32_1 = arith.constant 0 : i32
    return %c0_i32, %c0_i32_0 : i32, i32
  }
  func.func @transform_2(%arg0: i32) -> (i32, i32) {
    %c0_i32 = arith.constant 0 : i32
    %c0_i32_0 = arith.constant 0 : i32
    %c0_i32_1 = arith.constant 0 : i32
    return %c0_i32, %c0_i32_0 : i32, i32
  }
  func.func @transform_3(%arg0: i32) -> (i32, i32) {
    %c0_i32 = arith.constant 0 : i32
    %c0_i32_0 = arith.constant 0 : i32
    %c0_i32_1 = arith.constant 0 : i32
    return %c0_i32, %c0_i32_0 : i32, i32
  }
  func.func @transform_4(%arg0: i32) -> (i32, i32) {
    %c0_i32 = arith.constant 0 : i32
    %c0_i32_0 = arith.constant 0 : i32
    %c0_i32_1 = arith.constant 0 : i32
    return %c0_i32, %c0_i32_0 : i32, i32
  }
  func.func @transform_5(%arg0: i32) -> (i32, i32) {
    %c0_i32 = arith.constant 0 : i32
    %c0_i32_0 = arith.constant 0 : i32
    return %arg0, %c0_i32 : i32, i32
  }
}

module attributes {stable_mosaic.version = 11 : i64} {
  func.func @_standardize_resident_kernel(%arg0: i32, %arg1: memref<256x128xf32, #tpu.memory_space<vmem>>, %arg2: memref<1x128xf32, #tpu.memory_space<vmem>>, %arg3: memref<1x128xf32, #tpu.memory_space<vmem>>, %arg4: memref<128x128xbf16, #tpu.memory_space<vmem>>, %arg5: memref<1x128xf32, #tpu.memory_space<vmem>>, %arg6: memref<256x128xf32, #tpu.memory_space<vmem>>) attributes {dimension_semantics = [#tpu.dimension_semantics<parallel>], iteration_bounds = array<i64: 2>, scalar_prefetch = 0 : i64, scratch_operands = 0 : i64, tpu.core_type = #tpu.core_type<tc>, window_params = [{transform_indices = @transform_0, window_bounds = array<i64: 256, 128>}, {pipeline_mode = #tpu.pipeline_mode<synchronous>, transform_indices = @transform_1, window_bounds = array<i64: 1, 128>}, {pipeline_mode = #tpu.pipeline_mode<synchronous>, transform_indices = @transform_2, window_bounds = array<i64: 1, 128>}, {pipeline_mode = #tpu.pipeline_mode<synchronous>, transform_indices = @transform_3, window_bounds = array<i64: 128, 128>}, {pipeline_mode = #tpu.pipeline_mode<synchronous>, transform_indices = @transform_4, window_bounds = array<i64: 1, 128>}, {transform_indices = @transform_5, window_bounds = array<i64: 256, 128>}]} {
    %c0 = arith.constant 0 : index
    %c0_0 = arith.constant 0 : index
    %0 = vector.load %arg1[%c0, %c0_0] : memref<256x128xf32, #tpu.memory_space<vmem>>, vector<256x128xf32>
    %c0_1 = arith.constant 0 : index
    %c0_2 = arith.constant 0 : index
    %1 = vector.load %arg2[%c0_1, %c0_2] : memref<1x128xf32, #tpu.memory_space<vmem>>, vector<1x128xf32>
    %2 = vector.broadcast %1 : vector<1x128xf32> to vector<256x128xf32>
    %3 = arith.subf %0, %2 : vector<256x128xf32>
    %c0_3 = arith.constant 0 : index
    %c0_4 = arith.constant 0 : index
    %4 = vector.load %arg3[%c0_3, %c0_4] : memref<1x128xf32, #tpu.memory_space<vmem>>, vector<1x128xf32>
    %5 = vector.broadcast %4 : vector<1x128xf32> to vector<256x128xf32>
    %6 = arith.mulf %3, %5 : vector<256x128xf32>
    %7 = arith.truncf %6 : vector<256x128xf32> to vector<256x128xbf16>
    %c0_5 = arith.constant 0 : index
    %c0_6 = arith.constant 0 : index
    %8 = vector.load %arg4[%c0_5, %c0_6] : memref<128x128xbf16, #tpu.memory_space<vmem>>, vector<128x128xbf16>
    %cst = arith.constant dense<0.000000e+00> : vector<256x128xf32>
    %9 = tpu.matmul %7, %8, %cst {dimension_numbers = #tpu.dot_dimension_numbers<[1], [0], [0], [1], [0, 0, 1, 1], [], []>} : vector<256x128xbf16>, vector<128x128xbf16>, vector<256x128xf32> -> vector<256x128xf32>
    %c0_7 = arith.constant 0 : index
    %c0_8 = arith.constant 0 : index
    %10 = vector.load %arg5[%c0_7, %c0_8] : memref<1x128xf32, #tpu.memory_space<vmem>>, vector<1x128xf32>
    %11 = vector.broadcast %10 : vector<1x128xf32> to vector<256x128xf32>
    %12 = arith.addf %9, %11 : vector<256x128xf32>
    %c0_9 = arith.constant 0 : index
    %c0_10 = arith.constant 0 : index
    %13 = vector.load %arg6[%c0_9, %c0_10] : memref<256x128xf32, #tpu.memory_space<vmem>>, vector<256x128xf32>
    tpu.vector_store %arg6[%c0_9, %c0_10], %12 {strides = array<i32>} : memref<256x128xf32, #tpu.memory_space<vmem>>, vector<256x128xf32>,
    return
  }
  func.func @transform_0(%arg0: i32) -> (i32, i32) {
    %c0_i32 = arith.constant 0 : i32
    %c0_i32_0 = arith.constant 0 : i32
    return %arg0, %c0_i32 : i32, i32
  }
  func.func @transform_1(%arg0: i32) -> (i32, i32) {
    %c0_i32 = arith.constant 0 : i32
    %c0_i32_0 = arith.constant 0 : i32
    %c0_i32_1 = arith.constant 0 : i32
    return %c0_i32, %c0_i32_0 : i32, i32
  }
  func.func @transform_2(%arg0: i32) -> (i32, i32) {
    %c0_i32 = arith.constant 0 : i32
    %c0_i32_0 = arith.constant 0 : i32
    %c0_i32_1 = arith.constant 0 : i32
    return %c0_i32, %c0_i32_0 : i32, i32
  }
  func.func @transform_3(%arg0: i32) -> (i32, i32) {
    %c0_i32 = arith.constant 0 : i32
    %c0_i32_0 = arith.constant 0 : i32
    %c0_i32_1 = arith.constant 0 : i32
    return %c0_i32, %c0_i32_0 : i32, i32
  }
  func.func @transform_4(%arg0: i32) -> (i32, i32) {
    %c0_i32 = arith.constant 0 : i32
    %c0_i32_0 = arith.constant 0 : i32
    %c0_i32_1 = arith.constant 0 : i32
    return %c0_i32, %c0_i32_0 : i32, i32
  }
  func.func @transform_5(%arg0: i32) -> (i32, i32) {
    %c0_i32 = arith.constant 0 : i32
    %c0_i32_0 = arith.constant 0 : i32
    return %arg0, %c0_i32 : i32, i32
  }
}

</mosaic_0001>

<llo_original>
// kernel: tpu_custom_call.1
$region0: #{tpu_custom_call.1}
  #allocation0 [shape = 'u32[]', space=smem, size = 0x4, offset = 0x4, fixed_abs, tag = 'smem constant byte address 0x4 - core index']
  #allocation1 [shape = 'u32[72,128]{1,0:T(1,128)}', space=vmem, size = 0x9000, scoped, tag = 'internal scratch']
  %s0 = inlined_call_operand.hbm [shape: f32[512,128], index: 0, kind: input, shape index: {}]
  %s1 = inlined_call_operand.hbm [shape: f32[1,128], index: 1, kind: input, shape index: {}]
  %s2 = inlined_call_operand.vmem [shape: f32[1,128], index: 2, kind: input, shape index: {}]
  %s3 = inlined_call_operand.hbm [shape: bf16[128,128], index: 3, kind: input, shape index: {}]
  %s4 = inlined_call_operand.vmem [shape: f32[1,128], index: 4, kind: input, shape index: {}]
  %s5 = inlined_call_operand.hbm [shape: f32[512,128], index: 5, kind: output, shape index: {}]
  %s6 = sld [smem:[#allocation0]]
  $region65: #{tpu_custom_call.1} parent=0
    _
  %s8 = ssub.s32 1, %s6
  %s9 = scalar_select 0, %s8, %s6
  $region1: #{tpu_custom_call.1} parent=0
    #allocation2 [shape = 'u8[262144]{0}', space=vmem, size = 0x40000, scoped, tag = 'input window, operand 0']
    #allocation3 [shape = 's32[2]{0}', space=sflag, size = 0x8, scoped, tag = 'scoped memory for tpu_custom_call.1']
    #allocation4 [shape = 's32[2]{0}', space=sflag, size = 0x8, scoped, tag = 'scoped memory for tpu_custom_call.1']
    #allocation5 [shape = 'u8[512]{0}', space=vmem, size = 0x400, scoped, tag = 'input window, operand 1, single buffered']
    #allocation6 [shape = 's32[1]{0}', space=sflag, size = 0x4, scoped, tag = 'scoped memory for tpu_custom_call.1']
    #allocation7 [shape = 'u8[32768]{0}', space=vmem, size = 0x8000, scoped, tag = 'input window, operand 3, single buffered']
    #allocation8 [shape = 'u8[262144]{0}', space=vmem, size = 0x40000, scoped, tag = 'output window, operand 0']
    %10 = vsyncpa [#allocation3], 0
    %s11 = scalar_lea.sflag [#allocation3], 1
    %12 = vsyncpa %s11, 0
    %13 = vsyncpa [#allocation6], 0
    %14 = vsyncpa [#allocation4], 0
    %s15 = scalar_lea.sflag [#allocation4], 1
    %16 = vsyncpa %s15, 0
    loop: start=0, step=1, limit=4
    $region2: #{tpu_custom_call.1} parent=1 // loop_pre_header
      _
    $region3: #{tpu_custom_call.1} parent=1 // loop_header
      %s18 = sphi 0, %s22
      %p19 = scmp.ge.s32.totalorder %s18, 4
      %s28 = sphi 0, %s30
      %s31 = sphi 0, %s28
      %s32 = sphi 0, %s31
      %s48 = sphi 0, %s32
      %s52 = sphi 0, %s52
      %s54 = sphi 0, %s52
      %s55 = sphi 0, %s54
      %s69 = sphi 0, %s55
      %s73 = sphi 0, %s73
      %s75 = sphi 0, %s73
      %s76 = sphi 0, %s75
      %s90 = sphi 0, %s76
      %s94 = sphi 0, %s94
      %s96 = sphi 0, %s94
      %s97 = sphi 0, %s96
      %s111 = sphi 0, %s97
      %s115 = sphi 0, %s115
      %s117 = sphi 0, %s115
      %s118 = sphi 0, %s117
      %s132 = sphi 0, %s118
      %s138 = sphi 0, %s140
      %s141 = sphi 0, %s138
      %s142 = sphi 0, %s141
      %s158 = sphi 0, %s142
    $region4: #{tpu_custom_call.1} parent=1 // loop_header_branch
      %21 = sbr.rel (%p19) target = $region8
    $region5: #{tpu_custom_call.1} parent=1 // loop_body
      %s23 = ssub.s32 %s18, 1
      %s24 = ssub.s32 %s18, 2
      %s25 = sadd.s32 %s18, 1
      %s26 = ssub.s32 %s18, %s25
      %p27 = scmp.eq.s32.totalorder %s26, 0
      %s29 = sadd.s32 %s28, 1
      %s30 = scalar_select %p27, %s28, %s29
      %p33 = pneg %p27
      %p34 = scmp.eq.s32.totalorder %s18, 1
      %p35 = por %p33, %p34
      %p36 = scmp.ne.s32.totalorder %s28, %s31
      %p37 = scmp.eq.s32.totalorder %s18, 0
      %p38 = por %p36, %p37
      %p39 = scmp.ne.s32.totalorder %s28, %s31
      %p40 = scmp.eq.s32.totalorder %s23, 1
      %p41 = por %p39, %p40
      %p42 = scmp.ne.s32.totalorder %s31, %s32
      %p43 = scmp.eq.s32.totalorder %s23, 0
      %p44 = por %p42, %p43
      %p45 = scmp.ne.s32.totalorder %s31, %s32
      %p46 = scmp.eq.s32.totalorder %s24, 1
      %p47 = por %p45, %p46
      %p49 = scmp.ne.s32.totalorder %s32, %s48
      %p50 = scmp.eq.s32.totalorder %s24, 0
      %p51 = por %p49, %p50
      %s53 = sadd.s32 %s52, 1
      %p56 = scmp.eq.s32.totalorder %s18, 1
      %p57 = scmp.ne.s32.totalorder %s52, %s54
      %p58 = scmp.eq.s32.totalorder %s18, 0
      %p59 = por %p57, %p58
      %p60 = scmp.ne.s32.totalorder %s52, %s54
      %p61 = scmp.eq.s32.totalorder %s23, 1
      %p62 = por %p60, %p61
      %p63 = scmp.ne.s32.totalorder %s54, %s55
      %p64 = scmp.eq.s32.totalorder %s23, 0
      %p65 = por %p63, %p64
      %p66 = scmp.ne.s32.totalorder %s54, %s55
      %p67 = scmp.eq.s32.totalorder %s24, 1
      %p68 = por %p66, %p67
      %p70 = scmp.ne.s32.totalorder %s55, %s69
      %p71 = scmp.eq.s32.totalorder %s24, 0
      %p72 = por %p70, %p71
      %s74 = sadd.s32 %s73, 1
      %p77 = scmp.eq.s32.totalorder %s18, 1
      %p78 = scmp.ne.s32.totalorder %s73, %s75
      %p79 = scmp.eq.s32.totalorder %s18, 0
      %p80 = por %p78, %p79
      %p81 = scmp.ne.s32.totalorder %s73, %s75
      %p82 = scmp.eq.s32.totalorder %s23, 1
      %p83 = por %p81, %p82
      %p84 = scmp.ne.s32.totalorder %s75, %s76
      %p85 = scmp.eq.s32.totalorder %s23, 0
      %p86 = por %p84, %p85
      %p87 = scmp.ne.s32.totalorder %s75, %s76
      %p88 = scmp.eq.s32.totalorder %s24, 1
      %p89 = por %p87, %p88
      %p91 = scmp.ne.s32.totalorder %s76, %s90
      %p92 = scmp.eq.s32.totalorder %s24, 0
      %p93 = por %p91, %p92
      %s95 = sadd.s32 %s94, 1
      %p98 = scmp.eq.s32.totalorder %s18, 1
      %p99 = scmp.ne.s32.totalorder %s94, %s96
      %p100 = scmp.eq.s32.totalorder %s18, 0
      %p101 = por %p99, %p100
      %p102 = scmp.ne.s32.totalorder %s94, %s96
      %p103 = scmp.eq.s32.totalorder %s23, 1
      %p104 = por %p102, %p103
      %p105 = scmp.ne.s32.totalorder %s96, %s97
      %p106 = scmp.eq.s32.totalorder %s23, 0
      %p107 = por %p105, %p106
      %p108 = scmp.ne.s32.totalorder %s96, %s97
      %p109 = scmp.eq.s32.totalorder %s24, 1
      %p110 = por %p108, %p109
      %p112 = scmp.ne.s32.totalorder %s97, %s111
      %p113 = scmp.eq.s32.totalorder %s24, 0
      %p114 = por %p112, %p113
      %s116 = sadd.s32 %s115, 1
      %p119 = scmp.eq.s32.totalorder %s18, 1
      %p120 = scmp.ne.s32.totalorder %s115, %s117
      %p121 = scmp.eq.s32.totalorder %s18, 0
      %p122 = por %p120, %p121
      %p123 = scmp.ne.s32.totalorder %s115, %s117
      %p124 = scmp.eq.s32.totalorder %s23, 1
      %p125 = por %p123, %p124
      %p126 = scmp.ne.s32.totalorder %s117, %s118
      %p127 = scmp.eq.s32.totalorder %s23, 0
      %p128 = por %p126, %p127
      %p129 = scmp.ne.s32.totalorder %s117, %s118
      %p130 = scmp.eq.s32.totalorder %s24, 1
      %p131 = por %p129, %p130
      %p133 = scmp.ne.s32.totalorder %s118, %s132
      %p134 = scmp.eq.s32.totalorder %s24, 0
      %p135 = por %p133, %p134
      %s136 = ssub.s32 %s18, %s25
      %p137 = scmp.eq.s32.totalorder %s136, 0
      %s139 = sadd.s32 %s138, 1
      %s140 = scalar_select %p137, %s138, %s139
      %p143 = pneg %p137
      %p144 = scmp.eq.s32.totalorder %s18, 1
      %p145 = por %p143, %p144
      %p146 = scmp.ne.s32.totalorder %s138, %s141
      %p147 = scmp.eq.s32.totalorder %s18, 0
      %p148 = por %p146, %p147
      %p149 = scmp.ne.s32.totalorder %s138, %s141
      %p150 = scmp.eq.s32.totalorder %s23, 1
      %p151 = por %p149, %p150
      %p152 = scmp.ne.s32.totalorder %s141, %s142
      %p153 = scmp.eq.s32.totalorder %s23, 0
      %p154 = por %p152, %p153
      %p155 = scmp.ne.s32.totalorder %s141, %s142
      %p156 = scmp.eq.s32.totalorder %s24, 1
      %p157 = por %p155, %p156
      %p159 = scmp.ne.s32.totalorder %s142, %s158
      %p160 = scmp.eq.s32.totalorder %s24, 0
      %p161 = por %p159, %p160
      %p162 = scmp.le.s32.totalorder 1, %s18
      %p163 = scmp.lt.s32.totalorder %s18, 3
      %p164 = pnand %p162, %p163
      %p165 = pneg %p164
      // Predicated region
      $region9: #{tpu_custom_call.1} parent=5 // pred_check
        _
      $region10: #{tpu_custom_call.1} parent=5 // pred_check_branch
        %167 = sbr.rel (%p164) target = $region12
      $region11: #{tpu_custom_call.1} parent=5 // pred_region
        %s168 = ssub.s32 %s18, 1
        // Predicated region
        $region13: #{tpu_custom_call.1} parent=11 // pred_check
          %p169 = pneg %p65
        $region14: #{tpu_custom_call.1} parent=11 // pred_check_branch
          %171 = sbr.rel (%p169) target = $region16
        $region15: #{tpu_custom_call.1} parent=11 // pred_region
          %173 = vsyncadd [#allocation6], 0
          %s175 = sshll.u32 %s1, 4
          %s176 = int_to_ptr.hbm [resolvable:$true] %s175
          %s177 = sshll.u32 [#allocation5], 4
          %s178 = int_to_ptr.vmem [resolvable:$true] %s177
          %180 = dma.hbm_to_vmem [thread:$0]  %s176, 16, %s178, [#allocation6]
        $region16: #{tpu_custom_call.1} parent=11 // pred_fallthru
          _
        // Predicated region
        $region17: #{tpu_custom_call.1} parent=11 // pred_check
          %p181 = pneg %p86
        $region18: #{tpu_custom_call.1} parent=11 // pred_check_branch
          %183 = sbr.rel (%p181) target = $region20
        $region19: #{tpu_custom_call.1} parent=11 // pred_region
          _
        $region20: #{tpu_custom_call.1} parent=11 // pred_fallthru
          _
        // Predicated region
        $region21: #{tpu_custom_call.1} parent=11 // pred_check
          %p184 = pneg %p107
        $region22: #{tpu_custom_call.1} parent=11 // pred_check_branch
          %186 = sbr.rel (%p184) target = $region24
        $region23: #{tpu_custom_call.1} parent=11 // pred_region
          %188 = vsyncadd [#allocation6], 0
          %s189 = sshll.u32 %s3, 4
          %s190 = int_to_ptr.hbm [resolvable:$true] %s189
          %s191 = sshll.u32 [#allocation7], 4
          %s192 = int_to_ptr.vmem [resolvable:$true] %s191
          %197 = dma.hbm_to_vmem [thread:$0]  %s190, 1024, %s192, [#allocation6], 64, 64, 4
        $region24: #{tpu_custom_call.1} parent=11 // pred_fallthru
          _
        // Predicated region
        $region25: #{tpu_custom_call.1} parent=11 // pred_check
          %p198 = pneg %p128
        $region26: #{tpu_custom_call.1} parent=11 // pred_check_branch
          %200 = sbr.rel (%p198) target = $region28
        $region27: #{tpu_custom_call.1} parent=11 // pred_region
          _
        $region28: #{tpu_custom_call.1} parent=11 // pred_fallthru
          _
      $region12: #{tpu_custom_call.1} parent=5 // pred_fallthru
        _
      %p201 = scmp.lt.s32.totalorder %s18, 2
      // Predicated region
      $region29: #{tpu_custom_call.1} parent=5 // pred_check
        %p202 = pneg %p201
      $region30: #{tpu_custom_call.1} parent=5 // pred_check_branch
        %204 = sbr.rel (%p202) target = $region32
      $region31: #{tpu_custom_call.1} parent=5 // pred_region
        // Predicated region
        $region33: #{tpu_custom_call.1} parent=31 // pred_check
          %p205 = pneg %p38
        $region34: #{tpu_custom_call.1} parent=31 // pred_check_branch
          %207 = sbr.rel (%p205) target = $region36
        $region35: #{tpu_custom_call.1} parent=31 // pred_region
          %s208 = sand.u32 %s28, 1
          %s209 = scalar_lea.sflag [#allocation3], %s208
          %s210 = sand.u32 %s28, 1
          %s211 = smul.addr %s210, 256
          %s212 = scalar_lea.vmem [#allocation2], %s211
          %s213 = smul.u32 32, %s18
          %215 = vsyncadd %s209, 0
          %s216 = smul.addr %s213, 8
          %s217 = scalar_lea.hbm %s0, %s216
          %s218 = sshll.u32 %s217, 4
          %s219 = int_to_ptr.hbm [resolvable:$true] %s218
          %s220 = sshll.u32 %s212, 4
          %s221 = int_to_ptr.vmem [resolvable:$true] %s220
          %226 = dma.hbm_to_vmem [thread:$0]  %s219, 4096, %s221, %s209, 128, 128, 8
        $region36: #{tpu_custom_call.1} parent=31 // pred_fallthru
          _
      $region32: #{tpu_custom_call.1} parent=5 // pred_fallthru
        _
      %p227 = scmp.le.s32.totalorder 1, %s18
      %p228 = scmp.lt.s32.totalorder %s18, 3
      %p229 = pnand %p227, %p228
      %p230 = pneg %p229
      // Predicated region
      $region37: #{tpu_custom_call.1} parent=5 // pred_check
        _
      $region38: #{tpu_custom_call.1} parent=5 // pred_check_branch
        %232 = sbr.rel (%p229) target = $region40
      $region39: #{tpu_custom_call.1} parent=5 // pred_region
        %s233 = ssub.s32 %s18, 1
        %s234 = sand.u32 %s31, 1
        %s235 = scalar_lea.sflag [#allocation3], %s234
        %s236 = sand.u32 %s31, 1
        %s237 = smul.addr %s236, 256
        %s238 = scalar_lea.vmem [#allocation2], %s237
        // Predicated region
        $region41: #{tpu_custom_call.1} parent=39 // pred_check
          %p239 = pneg %p44
        $region42: #{tpu_custom_call.1} parent=39 // pred_check_branch
          %241 = sbr.rel (%p239) target = $region44
        $region43: #{tpu_custom_call.1} parent=39 // pred_region
          %243 = dma.done %s235, 4096
        $region44: #{tpu_custom_call.1} parent=39 // pred_fallthru
          _
        // Predicated region
        $region45: #{tpu_custom_call.1} parent=39 // pred_check
          %p244 = pneg %p65
        $region46: #{tpu_custom_call.1} parent=39 // pred_check_branch
          %246 = sbr.rel (%p244) target = $region48
        $region47: #{tpu_custom_call.1} parent=39 // pred_region
          %248 = dma.done [#allocation6], 16
        $region48: #{tpu_custom_call.1} parent=39 // pred_fallthru
          _
        // Predicated region
        $region49: #{tpu_custom_call.1} parent=39 // pred_check
          %p249 = pneg %p107
        $region50: #{tpu_custom_call.1} parent=39 // pred_check_branch
          %251 = sbr.rel (%p249) target = $region52
        $region51: #{tpu_custom_call.1} parent=39 // pred_region
          %253 = dma.done [#allocation6], 1024
        $region52: #{tpu_custom_call.1} parent=39 // pred_fallthru
          _
        %s254 = sand.u32 %s31, 1
        %s255 = scalar_lea.sflag [#allocation3], %s254
        %s256 = sand.u32 %s31, 1
        %s257 = smul.addr %s256, 256
        %s258 = scalar_lea.vmem [#allocation2], %s257
        %p259 = pneg %p44
        %p260 = pneg %p41
        %p261 = pneg %p65
        %p262 = pneg %p62
        %p263 = pneg %p86
        %p264 = pneg %p83
        %p265 = pneg %p107
        %p266 = pneg %p104
        %p267 = pneg %p128
        %p268 = pneg %p125
        %p269 = pneg %p154
        %p270 = pneg %p151
        %s271 = sand.u32 %s141, 1
        %s272 = scalar_lea.sflag [#allocation4], %s271
        %s273 = sand.u32 %s141, 1
        %s274 = smul.addr %s273, 256
        %s275 = scalar_lea.vmem [#allocation8], %s274
        %s276 = smul.u32 32, %s23
        %s277 = smul.u32 32, %s23
        %v278 = vld [vmem:[%s238] sm:$0xff]
        %v279 = vld [vmem:[%s238 + $0x8] sm:$0xff]
        %v280 = vld [vmem:[%s238 + $0x10] sm:$0xff]
        %v281 = vld [vmem:[%s238 + $0x18] sm:$0xff]
        %v282 = vld [vmem:[%s238 + $0x20] sm:$0xff]
        %v283 = vld [vmem:[%s238 + $0x28] sm:$0xff]
        %v284 = vld [vmem:[%s238 + $0x30] sm:$0xff]
        %v285 = vld [vmem:[%s238 + $0x38] sm:$0xff]
        %v286 = vld [vmem:[%s238 + $0x40] sm:$0xff]
        %v287 = vld [vmem:[%s238 + $0x48] sm:$0xff]
        %v288 = vld [vmem:[%s238 + $0x50] sm:$0xff]
        %v289 = vld [vmem:[%s238 + $0x58] sm:$0xff]
        %v290 = vld [vmem:[%s238 + $0x60] sm:$0xff]
        %v291 = vld [vmem:[%s238 + $0x68] sm:$0xff]
        %v292 = vld [vmem:[%s238 + $0x70] sm:$0xff]
        %v293 = vld [vmem:[%s238 + $0x78] sm:$0xff]
        %v294 = vld [vmem:[%s238 + $0x80] sm:$0xff]
        %v295 = vld [vmem:[%s238 + $0x88] sm:$0xff]
        %v296 = vld [vmem:[%s238 + $0x90] sm:$0xff]
        %v297 = vld [vmem:[%s238 + $0x98] sm:$0xff]
        %v298 = vld [vmem:[%s238 + $0xa0] sm:$0xff]
        %v299 = vld [vmem:[%s238 + $0xa8] sm:$0xff]
        %v300 = vld [vmem:[%s238 + $0xb0] sm:$0xff]
        %v301 = vld [vmem:[%s238 + $0xb8] sm:$0xff]
        %v302 = vld [vmem:[%s238 + $0xc0] sm:$0xff]
        %v303 = vld [vmem:[%s238 + $0xc8] sm:$0xff]
        %v304 = vld [vmem:[%s238 + $0xd0] sm:$0xff]
        %v305 = vld [vmem:[%s238 + $0xd8] sm:$0xff]
        %v306 = vld [vmem:[%s238 + $0xe0] sm:$0xff]
        %v307 = vld [vmem:[%s238 + $0xe8] sm:$0xff]
        %v308 = vld [vmem:[%s238 + $0xf0] sm:$0xff]
        %v309 = vld [vmem:[%s238 + $0xf8] sm:$0xff]
        %v310 = vld [vmem:[#allocation5] sm:$0x1]
        %v312 = vperm.slane %v310, 0
        %v314 = vsub.f32 %v278, %v312
        %v315 = vsub.f32 %v279, %v312
        %v316 = vsub.f32 %v280, %v312
        %v317 = vsub.f32 %v281, %v312
        %v318 = vsub.f32 %v282, %v312
        %v319 = vsub.f32 %v283, %v312
        %v320 = vsub.f32 %v284, %v312
        %v321 = vsub.f32 %v285, %v312
        %v322 = vsub.f32 %v286, %v312
        %v323 = vsub.f32 %v287, %v312
        %v324 = vsub.f32 %v288, %v312
        %v325 = vsub.f32 %v289, %v312
        %v326 = vsub.f32 %v290, %v312
        %v327 = vsub.f32 %v291, %v312
        %v328 = vsub.f32 %v292, %v312
        %v329 = vsub.f32 %v293, %v312
        %v330 = vsub.f32 %v294, %v312
        %v331 = vsub.f32 %v295, %v312
        %v332 = vsub.f32 %v296, %v312
        %v333 = vsub.f32 %v297, %v312
        %v334 = vsub.f32 %v298, %v312
        %v335 = vsub.f32 %v299, %v312
        %v336 = vsub.f32 %v300, %v312
        %v337 = vsub.f32 %v301, %v312
        %v338 = vsub.f32 %v302, %v312
        %v339 = vsub.f32 %v303, %v312
        %v340 = vsub.f32 %v304, %v312
        %v341 = vsub.f32 %v305, %v312
        %v342 = vsub.f32 %v306, %v312
        %v343 = vsub.f32 %v307, %v312
        %v344 = vsub.f32 %v308, %v312
        %v345 = vsub.f32 %v309, %v312
        %v346 = vld [vmem:[%s2] sm:$0x1]
        %v348 = vperm.slane %v346, 0
        %v350 = vmul.f32 %v314, %v348
        %v351 = vmul.f32 %v315, %v348
        %v352 = vmul.f32 %v316, %v348
        %v353 = vmul.f32 %v317, %v348
        %v354 = vmul.f32 %v318, %v348
        %v355 = vmul.f32 %v319, %v348
        %v356 = vmul.f32 %v320, %v348
        %v357 = vmul.f32 %v321, %v348
        %v358 = vmul.f32 %v322, %v348
        %v359 = vmul.f32 %v323, %v348
        %v360 = vmul.f32 %v324, %v348
        %v361 = vmul.f32 %v325, %v348
        %v362 = vmul.f32 %v326, %v348
        %v363 = vmul.f32 %v327, %v348
        %v364 = vmul.f32 %v328, %v348
        %v365 = vmul.f32 %v329, %v348
        %v366 = vmul.f32 %v330, %v348
        %v367 = vmul.f32 %v331, %v348
        %v368 = vmul.f32 %v332, %v348
        %v369 = vmul.f32 %v333, %v348
        %v370 = vmul.f32 %v334, %v348
        %v371 = vmul.f32 %v335, %v348
        %v372 = vmul.f32 %v336, %v348
        %v373 = vmul.f32 %v337, %v348
        %v374 = vmul.f32 %v338, %v348
        %v375 = vmul.f32 %v339, %v348
        %v376 = vmul.f32 %v340, %v348
        %v377 = vmul.f32 %v341, %v348
        %v378 = vmul.f32 %v342, %v348
        %v379 = vmul.f32 %v343, %v348
        %v380 = vmul.f32 %v344, %v348
        %v381 = vmul.f32 %v345, %v348
        %v382 = vpack.c.bf16 %v351, %v350
        %v383 = vpack.c.bf16 %v353, %v352
        %v384 = vpack.c.bf16 %v355, %v354
        %v385 = vpack.c.bf16 %v357, %v356
        %v386 = vpack.c.bf16 %v359, %v358
        %v387 = vpack.c.bf16 %v361, %v360
        %v388 = vpack.c.bf16 %v363, %v362
        %v389 = vpack.c.bf16 %v365, %v364
        %v390 = vpack.c.bf16 %v367, %v366
        %v391 = vpack.c.bf16 %v369, %v368
        %v392 = vpack.c.bf16 %v371, %v370
        %v393 = vpack.c.bf16 %v373, %v372
        %v394 = vpack.c.bf16 %v375, %v374
        %v395 = vpack.c.bf16 %v377, %v376
        %v396 = vpack.c.bf16 %v379, %v378
        %v397 = vpack.c.bf16 %v381, %v380
        %v398 = vld [vmem:[#allocation7] sm:$0xf]
        %v399 = vld [vmem:[#allocation7 + $0x4] sm:$0xf]
        %v400 = vld [vmem:[#allocation7 + $0x8] sm:$0xf]
        %v401 = vld [vmem:[#allocation7 + $0xc] sm:$0xf]
        %v402 = vld [vmem:[#allocation7 + $0x10] sm:$0xf]
        %v403 = vld [vmem:[#allocation7 + $0x14] sm:$0xf]
        %v404 = vld [vmem:[#allocation7 + $0x18] sm:$0xf]
        %v405 = vld [vmem:[#allocation7 + $0x1c] sm:$0xf]
        %v406 = vld [vmem:[#allocation7 + $0x20] sm:$0xf]
        %v407 = vld [vmem:[#allocation7 + $0x24] sm:$0xf]
        %v408 = vld [vmem:[#allocation7 + $0x28] sm:$0xf]
        %v409 = vld [vmem:[#allocation7 + $0x2c] sm:$0xf]
        %v410 = vld [vmem:[#allocation7 + $0x30] sm:$0xf]
        %v411 = vld [vmem:[#allocation7 + $0x34] sm:$0xf]
        %v412 = vld [vmem:[#allocation7 + $0x38] sm:$0xf]
        %v413 = vld [vmem:[#allocation7 + $0x3c] sm:$0xf]
        %v414 = vld [vmem:[%s4] sm:$0x1]
        %v416 = vperm.slane %v414, 0
        %v434 = vunpack.c.l.b16 %v398
        %v435 = vunpack.c.l.b16 %v399
        %v436 = vunpack.c.l.b16 %v400
        %v437 = vunpack.c.l.b16 %v401
        %v438 = vunpack.c.l.b16 %v402
        %v439 = vunpack.c.l.b16 %v403
        %v440 = vunpack.c.l.b16 %v404
        %v441 = vunpack.c.l.b16 %v405
        %v442 = vunpack.c.l.b16 %v406
        %v443 = vunpack.c.l.b16 %v407
        %v444 = vunpack.c.l.b16 %v408
        %v445 = vunpack.c.l.b16 %v409
        %v446 = vunpack.c.l.b16 %v410
        %v447 = vunpack.c.l.b16 %v411
        %v448 = vunpack.c.l.b16 %v412
        %v449 = vunpack.c.l.b16 %v413
        %v450 = vpack.c.b16 %v435, %v434
        %v451 = vpack.c.b16 %v437, %v436
        %v452 = vpack.c.b16 %v439, %v438
        %v453 = vpack.c.b16 %v441, %v440
        %v454 = vpack.c.b16 %v443, %v442
        %v455 = vpack.c.b16 %v445, %v444
        %v456 = vpack.c.b16 %v447, %v446
        %v457 = vpack.c.b16 %v449, %v448
        %466 = vmatpush.bf16.msra.mxu0 %v457
        %467 = vmatpush.bf16.msra.mxu0 %v456
        %468 = vmatpush.bf16.msra.mxu0 %v455
        %469 = vmatpush.bf16.msra.mxu0 %v454
        %470 = vmatpush.bf16.msra.mxu0 %v453
        %471 = vmatpush.bf16.msra.mxu0 %v452
        %472 = vmatpush.bf16.msra.mxu0 %v451
        %473 = vmatpush.bf16.msra.mxu0 %v450
        %474 = vmatmul.bf16.gmra.mxu0 %v382
        %v475 = vpop.f32.mrf.mxu0
        %v476 = vadd.f32 %v416, %v475
        %v477 = vpop.f32.mrf.mxu0
        %v478 = vadd.f32 %v416, %v477
        %479 = vmatmul.bf16.gmra.mxu0 %v383
        %v480 = vpop.f32.mrf.mxu0
        %v481 = vadd.f32 %v416, %v480
        %v482 = vpop.f32.mrf.mxu0
        %v483 = vadd.f32 %v416, %v482
        %484 = vmatmul.bf16.gmra.mxu0 %v384
        %v485 = vpop.f32.mrf.mxu0
        %v486 = vadd.f32 %v416, %v485
        %v487 = vpop.f32.mrf.mxu0
        %v488 = vadd.f32 %v416, %v487
        %489 = vmatmul.bf16.gmra.mxu0 %v385
        %v490 = vpop.f32.mrf.mxu0
        %v491 = vadd.f32 %v416, %v490
        %v492 = vpop.f32.mrf.mxu0
        %v493 = vadd.f32 %v416, %v492
        %494 = vmatmul.bf16.gmra.mxu0 %v386
        %v495 = vpop.f32.mrf.mxu0
        %v496 = vadd.f32 %v416, %v495
        %v497 = vpop.f32.mrf.mxu0
        %v498 = vadd.f32 %v416, %v497
        %499 = vmatmul.bf16.gmra.mxu0 %v387
        %v500 = vpop.f32.mrf.mxu0
        %v501 = vadd.f32 %v416, %v500
        %v502 = vpop.f32.mrf.mxu0
        %v503 = vadd.f32 %v416, %v502
        %504 = vmatmul.bf16.gmra.mxu0 %v388
        %v505 = vpop.f32.mrf.mxu0
        %v506 = vadd.f32 %v416, %v505
        %v507 = vpop.f32.mrf.mxu0
        %v508 = vadd.f32 %v416, %v507
        %509 = vmatmul.bf16.gmra.mxu0 %v389
        %v510 = vpop.f32.mrf.mxu0
        %v511 = vadd.f32 %v416, %v510
        %v512 = vpop.f32.mrf.mxu0
        %v513 = vadd.f32 %v416, %v512
        %514 = vmatmul.bf16.gmra.mxu0 %v390
        %v515 = vpop.f32.mrf.mxu0
        %v516 = vadd.f32 %v416, %v515
        %v517 = vpop.f32.mrf.mxu0
        %v518 = vadd.f32 %v416, %v517
        %519 = vmatmul.bf16.gmra.mxu0 %v391
        %v520 = vpop.f32.mrf.mxu0
        %v521 = vadd.f32 %v416, %v520
        %v522 = vpop.f32.mrf.mxu0
        %v523 = vadd.f32 %v416, %v522
        %524 = vmatmul.bf16.gmra.mxu0 %v392
        %v525 = vpop.f32.mrf.mxu0
        %v526 = vadd.f32 %v416, %v525
        %v527 = vpop.f32.mrf.mxu0
        %v528 = vadd.f32 %v416, %v527
        %529 = vmatmul.bf16.gmra.mxu0 %v393
        %v530 = vpop.f32.mrf.mxu0
        %v531 = vadd.f32 %v416, %v530
        %v532 = vpop.f32.mrf.mxu0
        %v533 = vadd.f32 %v416, %v532
        %534 = vmatmul.bf16.gmra.mxu0 %v394
        %v535 = vpop.f32.mrf.mxu0
        %v536 = vadd.f32 %v416, %v535
        %v537 = vpop.f32.mrf.mxu0
        %v538 = vadd.f32 %v416, %v537
        %539 = vmatmul.bf16.gmra.mxu0 %v395
        %v540 = vpop.f32.mrf.mxu0
        %v541 = vadd.f32 %v416, %v540
        %v542 = vpop.f32.mrf.mxu0
        %v543 = vadd.f32 %v416, %v542
        %544 = vmatmul.bf16.gmra.mxu0 %v396
        %v545 = vpop.f32.mrf.mxu0
        %v546 = vadd.f32 %v416, %v545
        %v547 = vpop.f32.mrf.mxu0
        %v548 = vadd.f32 %v416, %v547
        %549 = vmatmul.bf16.gmra.mxu0 %v397
        %v550 = vpop.f32.mrf.mxu0
        %v551 = vadd.f32 %v416, %v550
        %v552 = vpop.f32.mrf.mxu0
        %v553 = vadd.f32 %v416, %v552
        %554 = vdwg.mxu0
        %555 = vst [vmem:[%s275] sm:$0xff] %v476
        %556 = vst [vmem:[%s275 + $0x8] sm:$0xff] %v478
        %557 = vst [vmem:[%s275 + $0x10] sm:$0xff] %v481
        %558 = vst [vmem:[%s275 + $0x18] sm:$0xff] %v483
        %559 = vst [vmem:[%s275 + $0x20] sm:$0xff] %v486
        %560 = vst [vmem:[%s275 + $0x28] sm:$0xff] %v488
        %561 = vst [vmem:[%s275 + $0x30] sm:$0xff] %v491
        %562 = vst [vmem:[%s275 + $0x38] sm:$0xff] %v493
        %563 = vst [vmem:[%s275 + $0x40] sm:$0xff] %v496
        %564 = vst [vmem:[%s275 + $0x48] sm:$0xff] %v498
        %565 = vst [vmem:[%s275 + $0x50] sm:$0xff] %v501
        %566 = vst [vmem:[%s275 + $0x58] sm:$0xff] %v503
        %567 = vst [vmem:[%s275 + $0x60] sm:$0xff] %v506
        %568 = vst [vmem:[%s275 + $0x68] sm:$0xff] %v508
        %569 = vst [vmem:[%s275 + $0x70] sm:$0xff] %v511
        %570 = vst [vmem:[%s275 + $0x78] sm:$0xff] %v513
        %571 = vst [vmem:[%s275 + $0x80] sm:$0xff] %v516
        %572 = vst [vmem:[%s275 + $0x88] sm:$0xff] %v518
        %573 = vst [vmem:[%s275 + $0x90] sm:$0xff] %v521
        %574 = vst [vmem:[%s275 + $0x98] sm:$0xff] %v523
        %575 = vst [vmem:[%s275 + $0xa0] sm:$0xff] %v526
        %576 = vst [vmem:[%s275 + $0xa8] sm:$0xff] %v528
        %577 = vst [vmem:[%s275 + $0xb0] sm:$0xff] %v531
        %578 = vst [vmem:[%s275 + $0xb8] sm:$0xff] %v533
        %579 = vst [vmem:[%s275 + $0xc0] sm:$0xff] %v536
        %580 = vst [vmem:[%s275 + $0xc8] sm:$0xff] %v538
        %581 = vst [vmem:[%s275 + $0xd0] sm:$0xff] %v541
        %582 = vst [vmem:[%s275 + $0xd8] sm:$0xff] %v543
        %583 = vst [vmem:[%s275 + $0xe0] sm:$0xff] %v546
        %584 = vst [vmem:[%s275 + $0xe8] sm:$0xff] %v548
        %585 = vst [vmem:[%s275 + $0xf0] sm:$0xff] %v551
        %586 = vst [vmem:[%s275 + $0xf8] sm:$0xff] %v553
        %s587 = sand.u32 %s141, 1
        %s588 = scalar_lea.sflag [#allocation4], %s587
        %s589 = sand.u32 %s141, 1
        %s590 = smul.addr %s589, 256
        %s591 = scalar_lea.vmem [#allocation8], %s590
        // Predicated region
        $region53: #{tpu_custom_call.1} parent=39 // pred_check
          %p592 = pneg %p151
        $region54: #{tpu_custom_call.1} parent=39 // pred_check_branch
          %594 = sbr.rel (%p592) target = $region56
        $region55: #{tpu_custom_call.1} parent=39 // pred_region
          %s595 = smul.u32 32, %s23
          %597 = vsyncadd %s588, 0
          %s598 = smul.addr %s595, 8
          %s599 = scalar_lea.hbm %s5, %s598
          %s600 = sshll.u32 %s591, 4
          %s601 = int_to_ptr.vmem [resolvable:$true] %s600
          %s602 = sshll.u32 %s599, 4
          %s603 = int_to_ptr.hbm [resolvable:$true] %s602
          %608 = dma.vmem_to_hbm [thread:$0]  %s601, 4096, %s603, %s588, 128, 128, 8
        $region56: #{tpu_custom_call.1} parent=39 // pred_fallthru
          _
      $region40: #{tpu_custom_call.1} parent=5 // pred_fallthru
        _
      %p609 = scmp.le.s32.totalorder 2, %s18
      // Predicated region
      $region57: #{tpu_custom_call.1} parent=5 // pred_check
        %p610 = pneg %p609
      $region58: #{tpu_custom_call.1} parent=5 // pred_check_branch
        %612 = sbr.rel (%p610) target = $region60
      $region59: #{tpu_custom_call.1} parent=5 // pred_region
        %s613 = ssub.s32 %s18, 2
        // Predicated region
        $region61: #{tpu_custom_call.1} parent=59 // pred_check
          %p614 = pneg %p157
        $region62: #{tpu_custom_call.1} parent=59 // pred_check_branch
          %616 = sbr.rel (%p614) target = $region64
        $region63: #{tpu_custom_call.1} parent=59 // pred_region
          %s617 = sand.u32 %s142, 1
          %s618 = scalar_lea.sflag [#allocation4], %s617
          %s619 = sand.u32 %s142, 1
          %s620 = smul.addr %s619, 256
          %s621 = scalar_lea.vmem [#allocation8], %s620
          %623 = dma.done %s618, 4096
        $region64: #{tpu_custom_call.1} parent=59 // pred_fallthru
          _
      $region60: #{tpu_custom_call.1} parent=5 // pred_fallthru
        _
    $region6: #{tpu_custom_call.1} parent=1 // loop_footer
      %s22 = sadd.s32 1, %s18
    $region7: #{tpu_custom_call.1} parent=1 // loop_footer_branch
      %17 = sbr.rel target = $region3
    $region8: #{tpu_custom_call.1} parent=1 // loop_exit
      _
    %624 = vsyncpa [#allocation3], 1
    %s625 = scalar_lea.sflag [#allocation3], 1
    %626 = vsyncpa %s625, 1
    %627 = vsyncpa [#allocation6], 1
    %628 = vsyncpa [#allocation4], 1
    %s629 = scalar_lea.sflag [#allocation4], 1
    %630 = vsyncpa %s629, 1

// kernel: tpu_custom_call.1
$region0: #{tpu_custom_call.1}
  #allocation0 [shape = 'u32[]', space=smem, size = 0x4, offset = 0x4, fixed_abs, tag = 'smem constant byte address 0x4 - core index']
  #allocation1 [shape = 'u32[72,128]{1,0:T(1,128)}', space=vmem, size = 0x9000, scoped, tag = 'internal scratch']
  %s0 = inlined_call_operand.hbm [shape: f32[512,128], index: 0, kind: input, shape index: {}]
  %s1 = inlined_call_operand.hbm [shape: f32[1,128], index: 1, kind: input, shape index: {}]
  %s2 = inlined_call_operand.vmem [shape: f32[1,128], index: 2, kind: input, shape index: {}]
  %s3 = inlined_call_operand.hbm [shape: bf16[128,128], index: 3, kind: input, shape index: {}]
  %s4 = inlined_call_operand.vmem [shape: f32[1,128], index: 4, kind: input, shape index: {}]
  %s5 = inlined_call_operand.hbm [shape: f32[512,128], index: 5, kind: output, shape index: {}]
  %s6 = sld [smem:[#allocation0]]
  $region65: #{tpu_custom_call.1} parent=0
    _
  %s8 = ssub.s32 1, %s6
  %s9 = scalar_select 0, %s8, %s6
  $region1: #{tpu_custom_call.1} parent=0
    #allocation2 [shape = 'u8[262144]{0}', space=vmem, size = 0x40000, scoped, tag = 'input window, operand 0']
    #allocation3 [shape = 's32[2]{0}', space=sflag, size = 0x8, scoped, tag = 'scoped memory for tpu_custom_call.1']
    #allocation4 [shape = 's32[2]{0}', space=sflag, size = 0x8, scoped, tag = 'scoped memory for tpu_custom_call.1']
    #allocation5 [shape = 'u8[512]{0}', space=vmem, size = 0x400, scoped, tag = 'input window, operand 1, single buffered']
    #allocation6 [shape = 's32[1]{0}', space=sflag, size = 0x4, scoped, tag = 'scoped memory for tpu_custom_call.1']
    #allocation7 [shape = 'u8[32768]{0}', space=vmem, size = 0x8000, scoped, tag = 'input window, operand 3, single buffered']
    #allocation8 [shape = 'u8[262144]{0}', space=vmem, size = 0x40000, scoped, tag = 'output window, operand 0']
    %10 = vsyncpa [#allocation3], 0
    %s11 = scalar_lea.sflag [#allocation3], 1
    %12 = vsyncpa %s11, 0
    %13 = vsyncpa [#allocation6], 0
    %14 = vsyncpa [#allocation4], 0
    %s15 = scalar_lea.sflag [#allocation4], 1
    %16 = vsyncpa %s15, 0
    loop: start=0, step=1, limit=4
    $region2: #{tpu_custom_call.1} parent=1 // loop_pre_header
      _
    $region3: #{tpu_custom_call.1} parent=1 // loop_header
      %s18 = sphi 0, %s22
      %p19 = scmp.ge.s32.totalorder %s18, 4
      %s28 = sphi 0, %s30
      %s31 = sphi 0, %s28
      %s32 = sphi 0, %s31
      %s48 = sphi 0, %s32
      %s52 = sphi 0, %s52
      %s54 = sphi 0, %s52
      %s55 = sphi 0, %s54
      %s69 = sphi 0, %s55
      %s73 = sphi 0, %s73
      %s75 = sphi 0, %s73
      %s76 = sphi 0, %s75
      %s90 = sphi 0, %s76
      %s94 = sphi 0, %s94
      %s96 = sphi 0, %s94
      %s97 = sphi 0, %s96
      %s111 = sphi 0, %s97
      %s115 = sphi 0, %s115
      %s117 = sphi 0, %s115
      %s118 = sphi 0, %s117
      %s132 = sphi 0, %s118
      %s138 = sphi 0, %s140
      %s141 = sphi 0, %s138
      %s142 = sphi 0, %s141
      %s158 = sphi 0, %s142
    $region4: #{tpu_custom_call.1} parent=1 // loop_header_branch
      %21 = sbr.rel (%p19) target = $region8
    $region5: #{tpu_custom_call.1} parent=1 // loop_body
      %s23 = ssub.s32 %s18, 1
      %s24 = ssub.s32 %s18, 2
      %s25 = sadd.s32 %s18, 1
      %s26 = ssub.s32 %s18, %s25
      %p27 = scmp.eq.s32.totalorder %s26, 0
      %s29 = sadd.s32 %s28, 1
      %s30 = scalar_select %p27, %s28, %s29
      %p33 = pneg %p27
      %p34 = scmp.eq.s32.totalorder %s18, 1
      %p35 = por %p33, %p34
      %p36 = scmp.ne.s32.totalorder %s28, %s31
      %p37 = scmp.eq.s32.totalorder %s18, 0
      %p38 = por %p36, %p37
      %p39 = scmp.ne.s32.totalorder %s28, %s31
      %p40 = scmp.eq.s32.totalorder %s23, 1
      %p41 = por %p39, %p40
      %p42 = scmp.ne.s32.totalorder %s31, %s32
      %p43 = scmp.eq.s32.totalorder %s23, 0
      %p44 = por %p42, %p43
      %p45 = scmp.ne.s32.totalorder %s31, %s32
      %p46 = scmp.eq.s32.totalorder %s24, 1
      %p47 = por %p45, %p46
      %p49 = scmp.ne.s32.totalorder %s32, %s48
      %p50 = scmp.eq.s32.totalorder %s24, 0
      %p51 = por %p49, %p50
      %s53 = sadd.s32 %s52, 1
      %p56 = scmp.eq.s32.totalorder %s18, 1
      %p57 = scmp.ne.s32.totalorder %s52, %s54
      %p58 = scmp.eq.s32.totalorder %s18, 0
      %p59 = por %p57, %p58
      %p60 = scmp.ne.s32.totalorder %s52, %s54
      %p61 = scmp.eq.s32.totalorder %s23, 1
      %p62 = por %p60, %p61
      %p63 = scmp.ne.s32.totalorder %s54, %s55
      %p64 = scmp.eq.s32.totalorder %s23, 0
      %p65 = por %p63, %p64
      %p66 = scmp.ne.s32.totalorder %s54, %s55
      %p67 = scmp.eq.s32.totalorder %s24, 1
      %p68 = por %p66, %p67
      %p70 = scmp.ne.s32.totalorder %s55, %s69
      %p71 = scmp.eq.s32.totalorder %s24, 0
      %p72 = por %p70, %p71
      %s74 = sadd.s32 %s73, 1
      %p77 = scmp.eq.s32.totalorder %s18, 1
      %p78 = scmp.ne.s32.totalorder %s73, %s75
      %p79 = scmp.eq.s32.totalorder %s18, 0
      %p80 = por %p78, %p79
      %p81 = scmp.ne.s32.totalorder %s73, %s75
      %p82 = scmp.eq.s32.totalorder %s23, 1
      %p83 = por %p81, %p82
      %p84 = scmp.ne.s32.totalorder %s75, %s76
      %p85 = scmp.eq.s32.totalorder %s23, 0
      %p86 = por %p84, %p85
      %p87 = scmp.ne.s32.totalorder %s75, %s76
      %p88 = scmp.eq.s32.totalorder %s24, 1
      %p89 = por %p87, %p88
      %p91 = scmp.ne.s32.totalorder %s76, %s90
      %p92 = scmp.eq.s32.totalorder %s24, 0
      %p93 = por %p91, %p92
      %s95 = sadd.s32 %s94, 1
      %p98 = scmp.eq.s32.totalorder %s18, 1
      %p99 = scmp.ne.s32.totalorder %s94, %s96
      %p100 = scmp.eq.s32.totalorder %s18, 0
      %p101 = por %p99, %p100
      %p102 = scmp.ne.s32.totalorder %s94, %s96
      %p103 = scmp.eq.s32.totalorder %s23, 1
      %p104 = por %p102, %p103
      %p105 = scmp.ne.s32.totalorder %s96, %s97
      %p106 = scmp.eq.s32.totalorder %s23, 0
      %p107 = por %p105, %p106
      %p108 = scmp.ne.s32.totalorder %s96, %s97
      %p109 = scmp.eq.s32.totalorder %s24, 1
      %p110 = por %p108, %p109
      %p112 = scmp.ne.s32.totalorder %s97, %s111
      %p113 = scmp.eq.s32.totalorder %s24, 0
      %p114 = por %p112, %p113
      %s116 = sadd.s32 %s115, 1
      %p119 = scmp.eq.s32.totalorder %s18, 1
      %p120 = scmp.ne.s32.totalorder %s115, %s117
      %p121 = scmp.eq.s32.totalorder %s18, 0
      %p122 = por %p120, %p121
      %p123 = scmp.ne.s32.totalorder %s115, %s117
      %p124 = scmp.eq.s32.totalorder %s23, 1
      %p125 = por %p123, %p124
      %p126 = scmp.ne.s32.totalorder %s117, %s118
      %p127 = scmp.eq.s32.totalorder %s23, 0
      %p128 = por %p126, %p127
      %p129 = scmp.ne.s32.totalorder %s117, %s118
      %p130 = scmp.eq.s32.totalorder %s24, 1
      %p131 = por %p129, %p130
      %p133 = scmp.ne.s32.totalorder %s118, %s132
      %p134 = scmp.eq.s32.totalorder %s24, 0
      %p135 = por %p133, %p134
      %s136 = ssub.s32 %s18, %s25
      %p137 = scmp.eq.s32.totalorder %s136, 0
      %s139 = sadd.s32 %s138, 1
      %s140 = scalar_select %p137, %s138, %s139
      %p143 = pneg %p137
      %p144 = scmp.eq.s32.totalorder %s18, 1
      %p145 = por %p143, %p144
      %p146 = scmp.ne.s32.totalorder %s138, %s141
      %p147 = scmp.eq.s32.totalorder %s18, 0
      %p148 = por %p146, %p147
      %p149 = scmp.ne.s32.totalorder %s138, %s141
      %p150 = scmp.eq.s32.totalorder %s23, 1
      %p151 = por %p149, %p150
      %p152 = scmp.ne.s32.totalorder %s141, %s142
      %p153 = scmp.eq.s32.totalorder %s23, 0
      %p154 = por %p152, %p153
      %p155 = scmp.ne.s32.totalorder %s141, %s142
      %p156 = scmp.eq.s32.totalorder %s24, 1
      %p157 = por %p155, %p156
      %p159 = scmp.ne.s32.totalorder %s142, %s158
      %p160 = scmp.eq.s32.totalorder %s24, 0
      %p161 = por %p159, %p160
      %p162 = scmp.le.s32.totalorder 1, %s18
      %p163 = scmp.lt.s32.totalorder %s18, 3
      %p164 = pnand %p162, %p163
      %p165 = pneg %p164
      // Predicated region
      $region9: #{tpu_custom_call.1} parent=5 // pred_check
        _
      $region10: #{tpu_custom_call.1} parent=5 // pred_check_branch
        %167 = sbr.rel (%p164) target = $region12
      $region11: #{tpu_custom_call.1} parent=5 // pred_region
        %s168 = ssub.s32 %s18, 1
        // Predicated region
        $region13: #{tpu_custom_call.1} parent=11 // pred_check
          %p169 = pneg %p65
        $region14: #{tpu_custom_call.1} parent=11 // pred_check_branch
          %171 = sbr.rel (%p169) target = $region16
        $region15: #{tpu_custom_call.1} parent=11 // pred_region
          %173 = vsyncadd [#allocation6], 0
          %s175 = sshll.u32 %s1, 4
          %s176 = int_to_ptr.hbm [resolvable:$true] %s175
          %s177 = sshll.u32 [#allocation5], 4
          %s178 = int_to_ptr.vmem [resolvable:$true] %s177
          %180 = dma.hbm_to_vmem [thread:$0]  %s176, 16, %s178, [#allocation6]
        $region16: #{tpu_custom_call.1} parent=11 // pred_fallthru
          _
        // Predicated region
        $region17: #{tpu_custom_call.1} parent=11 // pred_check
          %p181 = pneg %p86
        $region18: #{tpu_custom_call.1} parent=11 // pred_check_branch
          %183 = sbr.rel (%p181) target = $region20
        $region19: #{tpu_custom_call.1} parent=11 // pred_region
          _
        $region20: #{tpu_custom_call.1} parent=11 // pred_fallthru
          _
        // Predicated region
        $region21: #{tpu_custom_call.1} parent=11 // pred_check
          %p184 = pneg %p107
        $region22: #{tpu_custom_call.1} parent=11 // pred_check_branch
          %186 = sbr.rel (%p184) target = $region24
        $region23: #{tpu_custom_call.1} parent=11 // pred_region
          %188 = vsyncadd [#allocation6], 0
          %s189 = sshll.u32 %s3, 4
          %s190 = int_to_ptr.hbm [resolvable:$true] %s189
          %s191 = sshll.u32 [#allocation7], 4
          %s192 = int_to_ptr.vmem [resolvable:$true] %s191
          %197 = dma.hbm_to_vmem [thread:$0]  %s190, 1024, %s192, [#allocation6], 64, 64, 4
        $region24: #{tpu_custom_call.1} parent=11 // pred_fallthru
          _
        // Predicated region
        $region25: #{tpu_custom_call.1} parent=11 // pred_check
          %p198 = pneg %p128
        $region26: #{tpu_custom_call.1} parent=11 // pred_check_branch
          %200 = sbr.rel (%p198) target = $region28
        $region27: #{tpu_custom_call.1} parent=11 // pred_region
          _
        $region28: #{tpu_custom_call.1} parent=11 // pred_fallthru
          _
      $region12: #{tpu_custom_call.1} parent=5 // pred_fallthru
        _
      %p201 = scmp.lt.s32.totalorder %s18, 2
      // Predicated region
      $region29: #{tpu_custom_call.1} parent=5 // pred_check
        %p202 = pneg %p201
      $region30: #{tpu_custom_call.1} parent=5 // pred_check_branch
        %204 = sbr.rel (%p202) target = $region32
      $region31: #{tpu_custom_call.1} parent=5 // pred_region
        // Predicated region
        $region33: #{tpu_custom_call.1} parent=31 // pred_check
          %p205 = pneg %p38
        $region34: #{tpu_custom_call.1} parent=31 // pred_check_branch
          %207 = sbr.rel (%p205) target = $region36
        $region35: #{tpu_custom_call.1} parent=31 // pred_region
          %s208 = sand.u32 %s28, 1
          %s209 = scalar_lea.sflag [#allocation3], %s208
          %s210 = sand.u32 %s28, 1
          %s211 = smul.addr %s210, 256
          %s212 = scalar_lea.vmem [#allocation2], %s211
          %s213 = smul.u32 32, %s18
          %215 = vsyncadd %s209, 0
          %s216 = smul.addr %s213, 8
          %s217 = scalar_lea.hbm %s0, %s216
          %s218 = sshll.u32 %s217, 4
          %s219 = int_to_ptr.hbm [resolvable:$true] %s218
          %s220 = sshll.u32 %s212, 4
          %s221 = int_to_ptr.vmem [resolvable:$true] %s220
          %226 = dma.hbm_to_vmem [thread:$0]  %s219, 4096, %s221, %s209, 128, 128, 8
        $region36: #{tpu_custom_call.1} parent=31 // pred_fallthru
          _
      $region32: #{tpu_custom_call.1} parent=5 // pred_fallthru
        _
      %p227 = scmp.le.s32.totalorder 1, %s18
      %p228 = scmp.lt.s32.totalorder %s18, 3
      %p229 = pnand %p227, %p228
      %p230 = pneg %p229
      // Predicated region
      $region37: #{tpu_custom_call.1} parent=5 // pred_check
        _
      $region38: #{tpu_custom_call.1} parent=5 // pred_check_branch
        %232 = sbr.rel (%p229) target = $region40
      $region39: #{tpu_custom_call.1} parent=5 // pred_region
        %s233 = ssub.s32 %s18, 1
        %s234 = sand.u32 %s31, 1
        %s235 = scalar_lea.sflag [#allocation3], %s234
        %s236 = sand.u32 %s31, 1
        %s237 = smul.addr %s236, 256
        %s238 = scalar_lea.vmem [#allocation2], %s237
        // Predicated region
        $region41: #{tpu_custom_call.1} parent=39 // pred_check
          %p239 = pneg %p44
        $region42: #{tpu_custom_call.1} parent=39 // pred_check_branch
          %241 = sbr.rel (%p239) target = $region44
        $region43: #{tpu_custom_call.1} parent=39 // pred_region
          %243 = dma.done %s235, 4096
        $region44: #{tpu_custom_call.1} parent=39 // pred_fallthru
          _
        // Predicated region
        $region45: #{tpu_custom_call.1} parent=39 // pred_check
          %p244 = pneg %p65
        $region46: #{tpu_custom_call.1} parent=39 // pred_check_branch
          %246 = sbr.rel (%p244) target = $region48
        $region47: #{tpu_custom_call.1} parent=39 // pred_region
          %248 = dma.done [#allocation6], 16
        $region48: #{tpu_custom_call.1} parent=39 // pred_fallthru
          _
        // Predicated region
        $region49: #{tpu_custom_call.1} parent=39 // pred_check
          %p249 = pneg %p107
        $region50: #{tpu_custom_call.1} parent=39 // pred_check_branch
          %251 = sbr.rel (%p249) target = $region52
        $region51: #{tpu_custom_call.1} parent=39 // pred_region
          %253 = dma.done [#allocation6], 1024
        $region52: #{tpu_custom_call.1} parent=39 // pred_fallthru
          _
        %s254 = sand.u32 %s31, 1
        %s255 = scalar_lea.sflag [#allocation3], %s254
        %s256 = sand.u32 %s31, 1
        %s257 = smul.addr %s256, 256
        %s258 = scalar_lea.vmem [#allocation2], %s257
        %p259 = pneg %p44
        %p260 = pneg %p41
        %p261 = pneg %p65
        %p262 = pneg %p62
        %p263 = pneg %p86
        %p264 = pneg %p83
        %p265 = pneg %p107
        %p266 = pneg %p104
        %p267 = pneg %p128
        %p268 = pneg %p125
        %p269 = pneg %p154
        %p270 = pneg %p151
        %s271 = sand.u32 %s141, 1
        %s272 = scalar_lea.sflag [#allocation4], %s271
        %s273 = sand.u32 %s141, 1
        %s274 = smul.addr %s273, 256
        %s275 = scalar_lea.vmem [#allocation8], %s274
        %s276 = smul.u32 32, %s23
        %s277 = smul.u32 32, %s23
        %v278 = vld [vmem:[%s238] sm:$0xff]
        %v279 = vld [vmem:[%s238 + $0x8] sm:$0xff]
        %v280 = vld [vmem:[%s238 + $0x10] sm:$0xff]
        %v281 = vld [vmem:[%s238 + $0x18] sm:$0xff]
        %v282 = vld [vmem:[%s238 + $0x20] sm:$0xff]
        %v283 = vld [vmem:[%s238 + $0x28] sm:$0xff]
        %v284 = vld [vmem:[%s238 + $0x30] sm:$0xff]
        %v285 = vld [vmem:[%s238 + $0x38] sm:$0xff]
        %v286 = vld [vmem:[%s238 + $0x40] sm:$0xff]
        %v287 = vld [vmem:[%s238 + $0x48] sm:$0xff]
        %v288 = vld [vmem:[%s238 + $0x50] sm:$0xff]
        %v289 = vld [vmem:[%s238 + $0x58] sm:$0xff]
        %v290 = vld [vmem:[%s238 + $0x60] sm:$0xff]
        %v291 = vld [vmem:[%s238 + $0x68] sm:$0xff]
        %v292 = vld [vmem:[%s238 + $0x70] sm:$0xff]
        %v293 = vld [vmem:[%s238 + $0x78] sm:$0xff]
        %v294 = vld [vmem:[%s238 + $0x80] sm:$0xff]
        %v295 = vld [vmem:[%s238 + $0x88] sm:$0xff]
        %v296 = vld [vmem:[%s238 + $0x90] sm:$0xff]
        %v297 = vld [vmem:[%s238 + $0x98] sm:$0xff]
        %v298 = vld [vmem:[%s238 + $0xa0] sm:$0xff]
        %v299 = vld [vmem:[%s238 + $0xa8] sm:$0xff]
        %v300 = vld [vmem:[%s238 + $0xb0] sm:$0xff]
        %v301 = vld [vmem:[%s238 + $0xb8] sm:$0xff]
        %v302 = vld [vmem:[%s238 + $0xc0] sm:$0xff]
        %v303 = vld [vmem:[%s238 + $0xc8] sm:$0xff]
        %v304 = vld [vmem:[%s238 + $0xd0] sm:$0xff]
        %v305 = vld [vmem:[%s238 + $0xd8] sm:$0xff]
        %v306 = vld [vmem:[%s238 + $0xe0] sm:$0xff]
        %v307 = vld [vmem:[%s238 + $0xe8] sm:$0xff]
        %v308 = vld [vmem:[%s238 + $0xf0] sm:$0xff]
        %v309 = vld [vmem:[%s238 + $0xf8] sm:$0xff]
        %v310 = vld [vmem:[#allocation5] sm:$0x1]
        %v312 = vperm.slane %v310, 0
        %v314 = vsub.f32 %v278, %v312
        %v315 = vsub.f32 %v279, %v312
        %v316 = vsub.f32 %v280, %v312
        %v317 = vsub.f32 %v281, %v312
        %v318 = vsub.f32 %v282, %v312
        %v319 = vsub.f32 %v283, %v312
        %v320 = vsub.f32 %v284, %v312
        %v321 = vsub.f32 %v285, %v312
        %v322 = vsub.f32 %v286, %v312
        %v323 = vsub.f32 %v287, %v312
        %v324 = vsub.f32 %v288, %v312
        %v325 = vsub.f32 %v289, %v312
        %v326 = vsub.f32 %v290, %v312
        %v327 = vsub.f32 %v291, %v312
        %v328 = vsub.f32 %v292, %v312
        %v329 = vsub.f32 %v293, %v312
        %v330 = vsub.f32 %v294, %v312
        %v331 = vsub.f32 %v295, %v312
        %v332 = vsub.f32 %v296, %v312
        %v333 = vsub.f32 %v297, %v312
        %v334 = vsub.f32 %v298, %v312
        %v335 = vsub.f32 %v299, %v312
        %v336 = vsub.f32 %v300, %v312
        %v337 = vsub.f32 %v301, %v312
        %v338 = vsub.f32 %v302, %v312
        %v339 = vsub.f32 %v303, %v312
        %v340 = vsub.f32 %v304, %v312
        %v341 = vsub.f32 %v305, %v312
        %v342 = vsub.f32 %v306, %v312
        %v343 = vsub.f32 %v307, %v312
        %v344 = vsub.f32 %v308, %v312
        %v345 = vsub.f32 %v309, %v312
        %v346 = vld [vmem:[%s2] sm:$0x1]
        %v348 = vperm.slane %v346, 0
        %v350 = vmul.f32 %v314, %v348
        %v351 = vmul.f32 %v315, %v348
        %v352 = vmul.f32 %v316, %v348
        %v353 = vmul.f32 %v317, %v348
        %v354 = vmul.f32 %v318, %v348
        %v355 = vmul.f32 %v319, %v348
        %v356 = vmul.f32 %v320, %v348
        %v357 = vmul.f32 %v321, %v348
        %v358 = vmul.f32 %v322, %v348
        %v359 = vmul.f32 %v323, %v348
        %v360 = vmul.f32 %v324, %v348
        %v361 = vmul.f32 %v325, %v348
        %v362 = vmul.f32 %v326, %v348
        %v363 = vmul.f32 %v327, %v348
        %v364 = vmul.f32 %v328, %v348
        %v365 = vmul.f32 %v329, %v348
        %v366 = vmul.f32 %v330, %v348
        %v367 = vmul.f32 %v331, %v348
        %v368 = vmul.f32 %v332, %v348
        %v369 = vmul.f32 %v333, %v348
        %v370 = vmul.f32 %v334, %v348
        %v371 = vmul.f32 %v335, %v348
        %v372 = vmul.f32 %v336, %v348
        %v373 = vmul.f32 %v337, %v348
        %v374 = vmul.f32 %v338, %v348
        %v375 = vmul.f32 %v339, %v348
        %v376 = vmul.f32 %v340, %v348
        %v377 = vmul.f32 %v341, %v348
        %v378 = vmul.f32 %v342, %v348
        %v379 = vmul.f32 %v343, %v348
        %v380 = vmul.f32 %v344, %v348
        %v381 = vmul.f32 %v345, %v348
        %v382 = vpack.c.bf16 %v351, %v350
        %v383 = vpack.c.bf16 %v353, %v352
        %v384 = vpack.c.bf16 %v355, %v354
        %v385 = vpack.c.bf16 %v357, %v356
        %v386 = vpack.c.bf16 %v359, %v358
        %v387 = vpack.c.bf16 %v361, %v360
        %v388 = vpack.c.bf16 %v363, %v362
        %v389 = vpack.c.bf16 %v365, %v364
        %v390 = vpack.c.bf16 %v367, %v366
        %v391 = vpack.c.bf16 %v369, %v368
        %v392 = vpack.c.bf16 %v371, %v370
        %v393 = vpack.c.bf16 %v373, %v372
        %v394 = vpack.c.bf16 %v375, %v374
        %v395 = vpack.c.bf16 %v377, %v376
        %v396 = vpack.c.bf16 %v379, %v378
        %v397 = vpack.c.bf16 %v381, %v380
        %v398 = vld [vmem:[#allocation7] sm:$0xf]
        %v399 = vld [vmem:[#allocation7 + $0x4] sm:$0xf]
        %v400 = vld [vmem:[#allocation7 + $0x8] sm:$0xf]
        %v401 = vld [vmem:[#allocation7 + $0xc] sm:$0xf]
        %v402 = vld [vmem:[#allocation7 + $0x10] sm:$0xf]
        %v403 = vld [vmem:[#allocation7 + $0x14] sm:$0xf]
        %v404 = vld [vmem:[#allocation7 + $0x18] sm:$0xf]
        %v405 = vld [vmem:[#allocation7 + $0x1c] sm:$0xf]
        %v406 = vld [vmem:[#allocation7 + $0x20] sm:$0xf]
        %v407 = vld [vmem:[#allocation7 + $0x24] sm:$0xf]
        %v408 = vld [vmem:[#allocation7 + $0x28] sm:$0xf]
        %v409 = vld [vmem:[#allocation7 + $0x2c] sm:$0xf]
        %v410 = vld [vmem:[#allocation7 + $0x30] sm:$0xf]
        %v411 = vld [vmem:[#allocation7 + $0x34] sm:$0xf]
        %v412 = vld [vmem:[#allocation7 + $0x38] sm:$0xf]
        %v413 = vld [vmem:[#allocation7 + $0x3c] sm:$0xf]
        %v414 = vld [vmem:[%s4] sm:$0x1]
        %v416 = vperm.slane %v414, 0
        %v434 = vunpack.c.l.b16 %v398
        %v435 = vunpack.c.l.b16 %v399
        %v436 = vunpack.c.l.b16 %v400
        %v437 = vunpack.c.l.b16 %v401
        %v438 = vunpack.c.l.b16 %v402
        %v439 = vunpack.c.l.b16 %v403
        %v440 = vunpack.c.l.b16 %v404
        %v441 = vunpack.c.l.b16 %v405
        %v442 = vunpack.c.l.b16 %v406
        %v443 = vunpack.c.l.b16 %v407
        %v444 = vunpack.c.l.b16 %v408
        %v445 = vunpack.c.l.b16 %v409
        %v446 = vunpack.c.l.b16 %v410
        %v447 = vunpack.c.l.b16 %v411
        %v448 = vunpack.c.l.b16 %v412
        %v449 = vunpack.c.l.b16 %v413
        %v450 = vpack.c.b16 %v435, %v434
        %v451 = vpack.c.b16 %v437, %v436
        %v452 = vpack.c.b16 %v439, %v438
        %v453 = vpack.c.b16 %v441, %v440
        %v454 = vpack.c.b16 %v443, %v442
        %v455 = vpack.c.b16 %v445, %v444
        %v456 = vpack.c.b16 %v447, %v446
        %v457 = vpack.c.b16 %v449, %v448
        %466 = vmatpush.bf16.msra.mxu0 %v457
        %467 = vmatpush.bf16.msra.mxu0 %v456
        %468 = vmatpush.bf16.msra.mxu0 %v455
        %469 = vmatpush.bf16.msra.mxu0 %v454
        %470 = vmatpush.bf16.msra.mxu0 %v453
        %471 = vmatpush.bf16.msra.mxu0 %v452
        %472 = vmatpush.bf16.msra.mxu0 %v451
        %473 = vmatpush.bf16.msra.mxu0 %v450
        %474 = vmatmul.bf16.gmra.mxu0 %v382
        %v475 = vpop.f32.mrf.mxu0
        %v476 = vadd.f32 %v416, %v475
        %v477 = vpop.f32.mrf.mxu0
        %v478 = vadd.f32 %v416, %v477
        %479 = vmatmul.bf16.gmra.mxu0 %v383
        %v480 = vpop.f32.mrf.mxu0
        %v481 = vadd.f32 %v416, %v480
        %v482 = vpop.f32.mrf.mxu0
        %v483 = vadd.f32 %v416, %v482
        %484 = vmatmul.bf16.gmra.mxu0 %v384
        %v485 = vpop.f32.mrf.mxu0
        %v486 = vadd.f32 %v416, %v485
        %v487 = vpop.f32.mrf.mxu0
        %v488 = vadd.f32 %v416, %v487
        %489 = vmatmul.bf16.gmra.mxu0 %v385
        %v490 = vpop.f32.mrf.mxu0
        %v491 = vadd.f32 %v416, %v490
        %v492 = vpop.f32.mrf.mxu0
        %v493 = vadd.f32 %v416, %v492
        %494 = vmatmul.bf16.gmra.mxu0 %v386
        %v495 = vpop.f32.mrf.mxu0
        %v496 = vadd.f32 %v416, %v495
        %v497 = vpop.f32.mrf.mxu0
        %v498 = vadd.f32 %v416, %v497
        %499 = vmatmul.bf16.gmra.mxu0 %v387
        %v500 = vpop.f32.mrf.mxu0
        %v501 = vadd.f32 %v416, %v500
        %v502 = vpop.f32.mrf.mxu0
        %v503 = vadd.f32 %v416, %v502
        %504 = vmatmul.bf16.gmra.mxu0 %v388
        %v505 = vpop.f32.mrf.mxu0
        %v506 = vadd.f32 %v416, %v505
        %v507 = vpop.f32.mrf.mxu0
        %v508 = vadd.f32 %v416, %v507
        %509 = vmatmul.bf16.gmra.mxu0 %v389
        %v510 = vpop.f32.mrf.mxu0
        %v511 = vadd.f32 %v416, %v510
        %v512 = vpop.f32.mrf.mxu0
        %v513 = vadd.f32 %v416, %v512
        %514 = vmatmul.bf16.gmra.mxu0 %v390
        %v515 = vpop.f32.mrf.mxu0
        %v516 = vadd.f32 %v416, %v515
        %v517 = vpop.f32.mrf.mxu0
        %v518 = vadd.f32 %v416, %v517
        %519 = vmatmul.bf16.gmra.mxu0 %v391
        %v520 = vpop.f32.mrf.mxu0
        %v521 = vadd.f32 %v416, %v520
        %v522 = vpop.f32.mrf.mxu0
        %v523 = vadd.f32 %v416, %v522
        %524 = vmatmul.bf16.gmra.mxu0 %v392
        %v525 = vpop.f32.mrf.mxu0
        %v526 = vadd.f32 %v416, %v525
        %v527 = vpop.f32.mrf.mxu0
        %v528 = vadd.f32 %v416, %v527
        %529 = vmatmul.bf16.gmra.mxu0 %v393
        %v530 = vpop.f32.mrf.mxu0
        %v531 = vadd.f32 %v416, %v530
        %v532 = vpop.f32.mrf.mxu0
        %v533 = vadd.f32 %v416, %v532
        %534 = vmatmul.bf16.gmra.mxu0 %v394
        %v535 = vpop.f32.mrf.mxu0
        %v536 = vadd.f32 %v416, %v535
        %v537 = vpop.f32.mrf.mxu0
        %v538 = vadd.f32 %v416, %v537
        %539 = vmatmul.bf16.gmra.mxu0 %v395
        %v540 = vpop.f32.mrf.mxu0
        %v541 = vadd.f32 %v416, %v540
        %v542 = vpop.f32.mrf.mxu0
        %v543 = vadd.f32 %v416, %v542
        %544 = vmatmul.bf16.gmra.mxu0 %v396
        %v545 = vpop.f32.mrf.mxu0
        %v546 = vadd.f32 %v416, %v545
        %v547 = vpop.f32.mrf.mxu0
        %v548 = vadd.f32 %v416, %v547
        %549 = vmatmul.bf16.gmra.mxu0 %v397
        %v550 = vpop.f32.mrf.mxu0
        %v551 = vadd.f32 %v416, %v550
        %v552 = vpop.f32.mrf.mxu0
        %v553 = vadd.f32 %v416, %v552
        %554 = vdwg.mxu0
        %555 = vst [vmem:[%s275] sm:$0xff] %v476
        %556 = vst [vmem:[%s275 + $0x8] sm:$0xff] %v478
        %557 = vst [vmem:[%s275 + $0x10] sm:$0xff] %v481
        %558 = vst [vmem:[%s275 + $0x18] sm:$0xff] %v483
        %559 = vst [vmem:[%s275 + $0x20] sm:$0xff] %v486
        %560 = vst [vmem:[%s275 + $0x28] sm:$0xff] %v488
        %561 = vst [vmem:[%s275 + $0x30] sm:$0xff] %v491
        %562 = vst [vmem:[%s275 + $0x38] sm:$0xff] %v493
        %563 = vst [vmem:[%s275 + $0x40] sm:$0xff] %v496
        %564 = vst [vmem:[%s275 + $0x48] sm:$0xff] %v498
        %565 = vst [vmem:[%s275 + $0x50] sm:$0xff] %v501
        %566 = vst [vmem:[%s275 + $0x58] sm:$0xff] %v503
        %567 = vst [vmem:[%s275 + $0x60] sm:$0xff] %v506
        %568 = vst [vmem:[%s275 + $0x68] sm:$0xff] %v508
        %569 = vst [vmem:[%s275 + $0x70] sm:$0xff] %v511
        %570 = vst [vmem:[%s275 + $0x78] sm:$0xff] %v513
        %571 = vst [vmem:[%s275 + $0x80] sm:$0xff] %v516
        %572 = vst [vmem:[%s275 + $0x88] sm:$0xff] %v518
        %573 = vst [vmem:[%s275 + $0x90] sm:$0xff] %v521
        %574 = vst [vmem:[%s275 + $0x98] sm:$0xff] %v523
        %575 = vst [vmem:[%s275 + $0xa0] sm:$0xff] %v526
        %576 = vst [vmem:[%s275 + $0xa8] sm:$0xff] %v528
        %577 = vst [vmem:[%s275 + $0xb0] sm:$0xff] %v531
        %578 = vst [vmem:[%s275 + $0xb8] sm:$0xff] %v533
        %579 = vst [vmem:[%s275 + $0xc0] sm:$0xff] %v536
        %580 = vst [vmem:[%s275 + $0xc8] sm:$0xff] %v538
        %581 = vst [vmem:[%s275 + $0xd0] sm:$0xff] %v541
        %582 = vst [vmem:[%s275 + $0xd8] sm:$0xff] %v543
        %583 = vst [vmem:[%s275 + $0xe0] sm:$0xff] %v546
        %584 = vst [vmem:[%s275 + $0xe8] sm:$0xff] %v548
        %585 = vst [vmem:[%s275 + $0xf0] sm:$0xff] %v551
        %586 = vst [vmem:[%s275 + $0xf8] sm:$0xff] %v553
        %s587 = sand.u32 %s141, 1
        %s588 = scalar_lea.sflag [#allocation4], %s587
        %s589 = sand.u32 %s141, 1
        %s590 = smul.addr %s589, 256
        %s591 = scalar_lea.vmem [#allocation8], %s590
        // Predicated region
        $region53: #{tpu_custom_call.1} parent=39 // pred_check
          %p592 = pneg %p151
        $region54: #{tpu_custom_call.1} parent=39 // pred_check_branch
          %594 = sbr.rel (%p592) target = $region56
        $region55: #{tpu_custom_call.1} parent=39 // pred_region
          %s595 = smul.u32 32, %s23
          %597 = vsyncadd %s588, 0
          %s598 = smul.addr %s595, 8
          %s599 = scalar_lea.hbm %s5, %s598
          %s600 = sshll.u32 %s591, 4
          %s601 = int_to_ptr.vmem [resolvable:$true] %s600
          %s602 = sshll.u32 %s599, 4
          %s603 = int_to_ptr.hbm [resolvable:$true] %s602
          %608 = dma.vmem_to_hbm [thread:$0]  %s601, 4096, %s603, %s588, 128, 128, 8
        $region56: #{tpu_custom_call.1} parent=39 // pred_fallthru
          _
      $region40: #{tpu_custom_call.1} parent=5 // pred_fallthru
        _
      %p609 = scmp.le.s32.totalorder 2, %s18
      // Predicated region
      $region57: #{tpu_custom_call.1} parent=5 // pred_check
        %p610 = pneg %p609
      $region58: #{tpu_custom_call.1} parent=5 // pred_check_branch
        %612 = sbr.rel (%p610) target = $region60
      $region59: #{tpu_custom_call.1} parent=5 // pred_region
        %s613 = ssub.s32 %s18, 2
        // Predicated region
        $region61: #{tpu_custom_call.1} parent=59 // pred_check
          %p614 = pneg %p157
        $region62: #{tpu_custom_call.1} parent=59 // pred_check_branch
          %616 = sbr.rel (%p614) target = $region64
        $region63: #{tpu_custom_call.1} parent=59 // pred_region
          %s617 = sand.u32 %s142, 1
          %s618 = scalar_lea.sflag [#allocation4], %s617
          %s619 = sand.u32 %s142, 1
          %s620 = smul.addr %s619, 256
          %s621 = scalar_lea.vmem [#allocation8], %s620
          %623 = dma.done %s618, 4096
        $region64: #{tpu_custom_call.1} parent=59 // pred_fallthru
          _
      $region60: #{tpu_custom_call.1} parent=5 // pred_fallthru
        _
    $region6: #{tpu_custom_call.1} parent=1 // loop_footer
      %s22 = sadd.s32 1, %s18
    $region7: #{tpu_custom_call.1} parent=1 // loop_footer_branch
      %17 = sbr.rel target = $region3
    $region8: #{tpu_custom_call.1} parent=1 // loop_exit
      _
    %624 = vsyncpa [#allocation3], 1
    %s625 = scalar_lea.sflag [#allocation3], 1
    %626 = vsyncpa %s625, 1
    %627 = vsyncpa [#allocation6], 1
    %628 = vsyncpa [#allocation4], 1
    %s629 = scalar_lea.sflag [#allocation4], 1
    %630 = vsyncpa %s629, 1

</llo_original>
